<compile_context>
chip_gen: v7x
topology: tpu7x:2x2x1
jax: 0.10.0
libtpu: 0.0.40
codegen_flags: <defaults>
</compile_context>

<pallas_src>
import functools

import jax
import jax.numpy as jnp
from jax.experimental import pallas as pl
from jax.experimental.pallas import tpu as pltpu


# --------------------------------------------------------------------------- helpers
def _leaky(v, slope):
    return jnp.where(v > 0, v, slope * v)


def _weight_norm(v, g):
    """torch.nn.utils.weight_norm: w = g * v / ||v||, norm over all dims but 0."""
    norm = jnp.sqrt(jnp.sum(v.astype(jnp.float32) ** 2,
                            axis=tuple(range(1, v.ndim)), keepdims=True))
    return g * v / norm


def _choose_frames_per_tile(kl, hop, target_lanes, max_frames):
    """Frames per time tile: FT must divide kl, FT*hop must be a multiple of 128
    (lane-dense output stores) and <= target_lanes."""
    if kl * hop <= target_lanes and kl <= max_frames:
        return kl                                    # single tile covers everything
    best = None
    for d in range(1, kl):
        if kl % d:
            continue
        if d <= max_frames and d * hop <= target_lanes and (d * hop) % 128 == 0:
            best = d                                 # keep the largest qualifying divisor
    return best if best is not None else kl          # fallback: one (large) tile


# --------------------------------------------------------------------------- kernel
def _lvc_block_kernel(x_ref, kern_ref, lb_ref, w2_ref, b2_ref, o_ref, h_ref,
                      *, hop, K, Kc, dil, p2, FT, HF, slope):
    """One (batch, time-tile) grid step of LVC_ConvBlock.

    x_ref   : (1, Cin, Twin)          compute dtype, Twin = (FT+2*HF)*hop + 2*p1
    kern_ref: (1, FTE, Cout, K*Cin)   per-frame LVC weights (contraction on lanes)
    lb_ref  : (1, FTE, Cout, 1)       per-frame LVC bias (f32)
    w2_ref  : (Cout, Kc*Cout)         weight-normed dilated-conv weights
    b2_ref  : (Cout, 1)               conv bias (f32)
    o_ref   : (1, Cout, T)            output tile, T = FT*hop (lane dense)
    h_ref   : (Cout, FTE*hop)         VMEM scratch for the intermediate h
    """
    FTE = FT + 2 * HF
    T = FT * hop
    T_ext = FTE * hop

    x = x_ref[0]                                               # (Cin, Twin)
    # Shared LVC im2col for the whole extended tile: row k*Cin + i = x[i, t + k].
    if K > 1:
        xcol = jnp.concatenate([x[:, k:k + T_ext] for k in range(K)], axis=0)
    else:
        xcol = x[:, :T_ext]                                    # (K*Cin, T_ext)

    # Per-frame MXU matmul, written in place (no lane concatenation of frames).
    # NOTE: when hop >= 128 (typical audio hop) every matmul here is lane dense;
    # for tiny hops the frames could additionally be batched/block-diagonalised.
    for l in range(FTE):
        w_l = kern_ref[0, l]                                   # (Cout, K*Cin)
        h_l = jnp.dot(w_l, xcol[:, l * hop:(l + 1) * hop],
                      preferred_element_type=jnp.float32)      # (Cout, hop) f32 acc
        h_l = h_l + lb_ref[0, l]                               # per-frame bias (f32)
        h_l = _leaky(h_l, slope)
        h_ref[:, l * hop:(l + 1) * hop] = h_l.astype(h_ref.dtype)

    # Weight-normed dilated Conv1d over the tile (halo p2 comes from the extra
    # frames computed above), as a single lane-dense matmul with N = T lanes.
    off = HF * hop - p2
    if Kc > 1:
        hcol = jnp.concatenate([h_ref[:, off + k * dil: off + k * dil + T]
                                for k in range(Kc)], axis=0)   # (Kc*Cout, T)
    else:
        hcol = h_ref[:, off:off + T]
    y = jnp.dot(w2_ref[...], hcol, preferred_element_type=jnp.float32)   # (Cout, T)
    y = y + b2_ref[...]
    y = _leaky(y, slope)
    o_ref[0] = y.astype(o_ref.dtype)


# --------------------------------------------------------------------------- wrapper
def lvc_conv_block(x, kernel, lbias, conv_w_v, conv_w_g, conv_b, *,
                   conv_size, dilation, slope=0.2,
                   compute_dtype=jnp.bfloat16,
                   target_tile_lanes=2048, max_frames_per_tile=64,
                   frames_per_tile=None):
    """
    LVC_ConvBlock.forward.
      x:       (B, Cin, L)
      kernel:  (B, Cin, Cout, K, kl)   local convolution kernels
      lbias:   (B, Cout, kl)           local convolution bias
      conv_w_v, conv_w_g, conv_b:      weight_norm Conv1d params (v, g, bias)
    """
    B, Cin, L = x.shape
    _, _, Cout, K, kl = kernel.shape
    assert L % kl == 0, "length of (x, kernel) is not matched"
    hop = L // kl
    assert K % 2 == 1 and conv_size % 2 == 1, "odd kernel sizes assumed (as in the torch module)"
    p1 = (K - 1) // 2                                   # LVC pad (forward uses dilation=1)
    p2 = (conv_size * dilation - dilation) // 2         # dilated-conv pad

    # -------- time tiling --------
    if frames_per_tile is None:
        FT = _choose_frames_per_tile(kl, hop, target_tile_lanes, max_frames_per_tile)
    else:
        FT = int(frames_per_tile)
        assert kl % FT == 0 and (FT == kl or (FT * hop) % 128 == 0)
    n_tiles = kl // FT
    T = FT * hop
    HF = -(-p2 // hop)                                  # halo frames per side (usually 1)
    FTE = FT + 2 * HF
    T_ext = FTE * hop
    Twin = T_ext + 2 * p1

    cd = compute_dtype

    # -------- glue (HBM-side, one-time): weight norm, layouts, padding, halos --------
    w2 = _weight_norm(conv_w_v, conv_w_g)                                   # (Cout, Cout, Kc)
    w2_mat = jnp.transpose(w2, (0, 2, 1)).reshape(Cout, conv_size * Cout).astype(cd)
    b2_col = conv_b.reshape(Cout, 1).astype(jnp.float32)

    # LVC weights -> (frames, Cout, K*Cin): contraction on the weight's lane axis.
    kern_m = jnp.transpose(kernel, (0, 4, 2, 3, 1)).reshape(B, kl, Cout, K * Cin)
    # Zero halo frames implement the conv's zero padding outside [0, L).
    kern_p = jnp.pad(kern_m, ((0, 0), (HF, HF), (0, 0), (0, 0))).astype(cd)
    lb_p = jnp.pad(jnp.transpose(lbias, (0, 2, 1)),
                   ((0, 0), (HF, HF), (0, 0)))[..., None].astype(jnp.float32)

    fidx = jnp.arange(n_tiles)[:, None] * FT + jnp.arange(FTE)[None, :]     # (n_tiles, FTE)
    kern_win = kern_p[:, fidx].reshape(B * n_tiles, FTE, Cout, K * Cin)
    lb_win = lb_p[:, fidx].reshape(B * n_tiles, FTE, Cout, 1)

    # Pad x once in HBM and materialise the per-tile overlapping windows
    # (halo = HF*hop + p1 per side) so the kernel only needs static slices.
    x_big = jnp.pad(x, ((0, 0), (0, 0), (HF * hop + p1, HF * hop + p1))).astype(cd)
    tidx = jnp.arange(n_tiles)[:, None] * T + jnp.arange(Twin)[None, :]     # (n_tiles, Twin)
    x_win = jnp.transpose(x_big[:, :, tidx], (0, 2, 1, 3)).reshape(B * n_tiles, Cin, Twin)

    kern_fn = functools.partial(
        _lvc_block_kernel, hop=hop, K=K, Kc=conv_size, dil=dilation,
        p2=p2, FT=FT, HF=HF, slope=float(slope))

    # Per-grid-step VMEM footprint (in/out blocks are double-buffered) -> scoped limit.
    cb = jnp.dtype(cd).itemsize
    ob = jnp.dtype(x.dtype).itemsize
    per_step = (Cin * Twin * cb + FTE * Cout * (K * Cin) * cb + FTE * Cout * 4
                + Cout * conv_size * Cout * cb + Cout * 4 + Cout * T * ob)
    vmem_limit = int(min(64 * 2 ** 20,
                         max(16 * 2 ** 20, 4 * (2 * per_step + Cout * T_ext * cb))))

    return pl.pallas_call(
        kern_fn,
        out_shape=jax.ShapeDtypeStruct((B, Cout, L), x.dtype),
        grid_spec=pltpu.PrefetchScalarGridSpec(
            num_scalar_prefetch=0,
            grid=(B, n_tiles),
            in_specs=[
                pl.BlockSpec((1, Cin, Twin),
                             lambda b, j: (b * n_tiles + j, 0, 0)),
                pl.BlockSpec((1, FTE, Cout, K * Cin),
                             lambda b, j: (b * n_tiles + j, 0, 0, 0)),
                pl.BlockSpec((1, FTE, Cout, 1),
                             lambda b, j: (b * n_tiles + j, 0, 0, 0)),
                # grid-invariant operands: constant index_map -> fetched only once
                pl.BlockSpec((Cout, conv_size * Cout), lambda b, j: (0, 0)),
                pl.BlockSpec((Cout, 1), lambda b, j: (0, 0)),
            ],
            out_specs=pl.BlockSpec((1, Cout, T), lambda b, j: (b, 0, j)),
            scratch_shapes=[pltpu.VMEM((Cout, T_ext), cd)],
        ),
        compiler_params=pltpu.CompilerParams(
            dimension_semantics=("parallel", "parallel"),
            vmem_limit_bytes=vmem_limit),
    )(x_win, kern_win, lb_win, w2_mat, b2_col)


# --------------------------------------------------------------------------- references
def lvc_conv_block_reference(x, kernel, lbias, conv_w_v, conv_w_g, conv_b, *,
                             conv_size, dilation, slope=0.2,
                             compute_dtype=jnp.bfloat16):
    """Pure-JAX reference for LVC_ConvBlock.forward (mirrors the kernel's precision)."""
    B, Cin, L = x.shape
    _, _, Cout, K, kl = kernel.shape
    hop = L // kl
    p1 = (K - 1) // 2
    cd = compute_dtype
    x_pad = jnp.pad(x, ((0, 0), (0, 0), (p1, p1))).astype(cd)
    xk = jnp.stack([x_pad[:, :, k:k + L] for k in range(K)], axis=-1)       # (B,Cin,L,K)
    xk = xk.reshape(B, Cin, kl, hop, K)
    h = jnp.einsum('bilsk,biokl->bols', xk, kernel.astype(cd),
                   preferred_element_type=jnp.float32)
    h = h + lbias[:, :, :, None].astype(jnp.float32)
    h = _leaky(h.reshape(B, Cout, L), slope)
    w2 = _weight_norm(conv_w_v, conv_w_g).astype(cd)                        # (Cout,Cout,Kc)
    p2 = (conv_size * dilation - dilation) // 2
    h_p = jnp.pad(h.astype(cd), ((0, 0), (0, 0), (p2, p2)))
    hk = jnp.stack([h_p[:, :, k * dilation:k * dilation + L]
                    for k in range(conv_size)], axis=-1)                    # (B,Cout,L,Kc)
    y = jnp.einsum('bclk,ock->bol', hk, w2, preferred_element_type=jnp.float32)
    y = y + conv_b[None, :, None].astype(jnp.float32)
    y = _leaky(y, slope)
    return y.astype(x.dtype)


# --------------------------------------------------------------------------- full module
def _kernel_predictor(c, p, conv_in, conv_out, ker_size, n_layers):
    """KernelPredictor.forward: two weight-normed 1x1 convs + reshape."""
    B, _, kl = c.shape
    wk = _weight_norm(p["kernel_v"], p["kernel_g"])[:, :, 0]     # (layers*in*out*K, cond)
    wb = _weight_norm(p["bias_v"], p["bias_g"])[:, :, 0]         # (layers*out, cond)
    k = jnp.einsum("oc,bcl->bol", wk, c) + p["kernel_b"][None, :, None]
    b = jnp.einsum("oc,bcl->bol", wb, c) + p["bias_b"][None, :, None]
    kernels = k.reshape(B, n_layers, conv_in, conv_out, ker_size, kl)
    bias = b.reshape(B, n_layers, conv_out, kl)
    return kernels, bias


def _tdiscriminator(x, c, params, hp, block_fn, compute_dtype):
    """TDiscriminator.forward with `block_fn` implementing LVC_ConvBlock."""
    hidden = hp["hidden_dim"]
    n_layers = len(hp["dilations"])
    # TODO(synk): the 1x1 convs (kernel predictor / preconv / postconv) are plain
    # matmuls left to XLA; only the LVC blocks use the custom Pallas kernel.
    kernels, bias = _kernel_predictor(c, params["kp"], hidden, hidden,
                                      hp["ker_size"], n_layers)
    w_pre = _weight_norm(params["pre_v"], params["pre_g"])       # (hidden, 1, 1)
    h = w_pre[:, 0, 0][None, :, None] * x + params["pre_b"][None, :, None]
    h = _leaky(h, hp["lReLU_slope"])
    # NOTE: the original torch constructor passes hp.tdisc.ker_size as the block's
    # lReLU_slope argument; reproduced here for fidelity to the module.
    block_slope = float(hp["ker_size"])
    for i, d in enumerate(hp["dilations"]):
        blk = params["blocks"][i]
        h = block_fn(h, kernels[:, i], bias[:, i], blk["v"], blk["g"], blk["b"],
                     conv_size=hp["conv_size"], dilation=d, slope=block_slope,
                     compute_dtype=compute_dtype)
    w_post = _weight_norm(params["post_v"], params["post_g"])    # (1, hidden, 1)
    y = jnp.einsum("oc,bcl->bol", w_post[:, :, 0], h) + params["post_b"][None, :, None]
    return y


def tdiscriminator_forward(x, c, params, hp, compute_dtype=jnp.bfloat16):
    return _tdiscriminator(x, c, params, hp, lvc_conv_block, compute_dtype)


def tdiscriminator_reference(x, c, params, hp, compute_dtype=jnp.bfloat16):
    return _tdiscriminator(x, c, params, hp, lvc_conv_block_reference, compute_dtype)


# --------------------------------------------------------------------------- main
if __name__ == "__main__":
    key = jax.random.PRNGKey(0)
    # small hp.tdisc-like config
    hp = dict(hidden_dim=8, dilations=(1, 2), conv_size=3, ker_size=3, lReLU_slope=0.2)
    B, cond_ch = 2, 512
    kl, hop = 4, 32                       # conditioning length, hop  ->  L = 128
    L = kl * hop
    hidden, K, n_layers = hp["hidden_dim"], hp["ker_size"], len(hp["dilations"])

    keys = iter(jax.random.split(key, 32))

    def rnd(shape, scale=0.1):
        return jax.random.normal(next(keys), shape, jnp.float32) * scale

    params = dict(
        kp=dict(
            kernel_v=rnd((hidden * hidden * K * n_layers, cond_ch, 1), 0.02),
            kernel_g=jnp.abs(rnd((hidden * hidden * K * n_layers, 1, 1), 0.3)) + 0.3,
            kernel_b=rnd((hidden * hidden * K * n_layers,), 0.02),
            bias_v=rnd((hidden * n_layers, cond_ch, 1), 0.02),
            bias_g=jnp.abs(rnd((hidden * n_layers, 1, 1), 0.3)) + 0.3,
            bias_b=rnd((hidden * n_layers,), 0.02),
        ),
        pre_v=rnd((hidden, 1, 1), 1.0),
        pre_g=jnp.abs(rnd((hidden, 1, 1), 0.3)) + 0.5,
        pre_b=rnd((hidden,), 0.1),
        blocks=[dict(v=rnd((hidden, hidden, hp["conv_size"]), 0.1),
                     g=jnp.abs(rnd((hidden, 1, 1), 0.25)) + 0.25,
                     b=rnd((hidden,), 0.1))
                for _ in range(n_layers)],
        post_v=rnd((1, hidden, 1), 0.3),
        post_g=jnp.abs(rnd((1, 1, 1), 0.3)) + 0.3,
        post_b=rnd((1,), 0.1),
    )

    x = jax.random.normal(next(keys), (B, 1, L), jnp.float32)
    c = jax.random.normal(next(keys), (B, cond_ch, kl), jnp.float32) * 0.1

    # ---- check 1: single LVC block, multi-tile path (exercises the conv halo), f32 ----
    kl2, hop2 = 8, 32
    L2 = kl2 * hop2
    xb = jax.random.normal(next(keys), (B, hidden, L2), jnp.float32)
    kb = rnd((B, hidden, hidden, K, kl2), 0.1)
    bb = rnd((B, hidden, kl2), 0.1)
    blk0 = params["blocks"][0]
    out_blk = lvc_conv_block(xb, kb, bb, blk0["v"], blk0["g"], blk0["b"],
                             conv_size=hp["conv_size"], dilation=2, slope=0.2,
                             compute_dtype=jnp.float32, frames_per_tile=4)
    out_blk = jax.block_until_ready(out_blk)
    ref_blk = lvc_conv_block_reference(xb, kb, bb, blk0["v"], blk0["g"], blk0["b"],
                                       conv_size=hp["conv_size"], dilation=2, slope=0.2,
                                       compute_dtype=jnp.float32)
    assert out_blk.shape == (B, hidden, L2)
    assert jnp.allclose(out_blk, ref_blk, atol=1e-4, rtol=1e-4), (
        f"block max abs err = {float(jnp.max(jnp.abs(out_blk - ref_blk)))}")

    # ---- check 2: full TDiscriminator forward, f32 compute (exact module semantics) ----
    out_f32 = jax.block_until_ready(
        tdiscriminator_forward(x, c, params, hp, compute_dtype=jnp.float32))
    ref_f32 = tdiscriminator_reference(x, c, params, hp, compute_dtype=jnp.float32)
    assert out_f32.shape == (B, 1, L)
    assert jnp.allclose(out_f32, ref_f32, atol=1e-3, rtol=1e-3), (
        f"f32 e2e max abs err = {float(jnp.max(jnp.abs(out_f32 - ref_f32)))}")

    # ---- check 3: default bf16 fast path (f32 accumulation), under jit ----
    fwd = jax.jit(lambda x_, c_, p_: tdiscriminator_forward(x_, c_, p_, hp))
    out_bf = jax.block_until_ready(fwd(x, c, params))
    ref_bf = tdiscriminator_reference(x, c, params, hp)      # bf16-mirrored reference
    assert out_bf.shape == (B, 1, L)
    rel = float(jnp.linalg.norm(out_bf - ref_bf) / (jnp.linalg.norm(ref_bf) + 1e-12))
    assert rel < 5e-3, f"bf16 e2e relative L2 err = {rel}"

    print("KERNEL_OK")
</pallas_src>

<mosaic_0001>
module attributes {stable_mosaic.version = 11 : i64} {
  func.func @_lvc_block_kernel(%arg0: i32, %arg1: i32, %arg2: memref<1x8x194xf32, #tpu.memory_space<vmem>>, %arg3: memref<1x6x8x24xf32, #tpu.memory_space<vmem>>, %arg4: memref<1x6x8x1xf32, #tpu.memory_space<vmem>>, %arg5: memref<8x24xf32, #tpu.memory_space<vmem>>, %arg6: memref<8x1xf32, #tpu.memory_space<vmem>>, %arg7: memref<1x8x128xf32, #tpu.memory_space<vmem>>, %arg8: memref<8x192xf32, #tpu.memory_space<vmem>>) attributes {dimension_semantics = [#tpu.dimension_semantics<parallel>, #tpu.dimension_semantics<parallel>], iteration_bounds = array<i64: 2, 2>, scalar_prefetch = 0 : i64, scratch_operands = 1 : i64, tpu.core_type = #tpu.core_type<tc>, window_params = [{transform_indices = @transform_0, window_bounds = array<i64: 1, 8, 194>}, {transform_indices = @transform_1, window_bounds = array<i64: 1, 6, 8, 24>}, {transform_indices = @transform_2, window_bounds = array<i64: 1, 6, 8, 1>}, {pipeline_mode = #tpu.pipeline_mode<synchronous>, transform_indices = @transform_3, window_bounds = array<i64: 8, 24>}, {pipeline_mode = #tpu.pipeline_mode<synchronous>, transform_indices = @transform_4, window_bounds = array<i64: 8, 1>}, {transform_indices = @transform_5, window_bounds = array<i64: 1, 8, 128>}]} {
    %c0 = arith.constant 0 : index
    %c0_0 = arith.constant 0 : index
    %c0_1 = arith.constant 0 : index
    %0 = vector.load %arg2[%c0, %c0_0, %c0_1] : memref<1x8x194xf32, #tpu.memory_space<vmem>>, vector<1x8x194xf32>
    %1 = vector.shape_cast %0 : vector<1x8x194xf32> to vector<8x194xf32>
    %2 = vector.extract_strided_slice %1 {offsets = [0, 0], sizes = [8, 192], strides = [1, 1]} : vector<8x194xf32> to vector<8x192xf32>
    %3 = vector.extract_strided_slice %1 {offsets = [0, 1], sizes = [8, 192], strides = [1, 1]} : vector<8x194xf32> to vector<8x192xf32>
    %4 = vector.extract_strided_slice %1 {offsets = [0, 2], sizes = [8, 192], strides = [1, 1]} : vector<8x194xf32> to vector<8x192xf32>
    %5 = tpu.concatenate %2, %3, %4 in 0 : vector<8x192xf32>, vector<8x192xf32>, vector<8x192xf32> -> vector<24x192xf32>
    %c0_2 = arith.constant 0 : index
    %c0_3 = arith.constant 0 : index
    %c0_4 = arith.constant 0 : index
    %c0_5 = arith.constant 0 : index
    %6 = vector.load %arg3[%c0_2, %c0_3, %c0_4, %c0_5] : memref<1x6x8x24xf32, #tpu.memory_space<vmem>>, vector<1x1x8x24xf32>
    %7 = vector.shape_cast %6 : vector<1x1x8x24xf32> to vector<8x24xf32>
    %8 = vector.extract_strided_slice %5 {offsets = [0, 0], sizes = [24, 32], strides = [1, 1]} : vector<24x192xf32> to vector<24x32xf32>
    %cst = arith.constant dense<0.000000e+00> : vector<8x32xf32>
    %9 = tpu.matmul %7, %8, %cst {dimension_numbers = #tpu.dot_dimension_numbers<[1], [0], [0], [1], [0, 0, 1, 1], [], []>} : vector<8x24xf32>, vector<24x32xf32>, vector<8x32xf32> -> vector<8x32xf32>
    %c0_6 = arith.constant 0 : index
    %c0_7 = arith.constant 0 : index
    %c0_8 = arith.constant 0 : index
    %c0_9 = arith.constant 0 : index
    %10 = vector.load %arg4[%c0_6, %c0_7, %c0_8, %c0_9] : memref<1x6x8x1xf32, #tpu.memory_space<vmem>>, vector<1x1x8x1xf32>
    %11 = vector.shape_cast %10 : vector<1x1x8x1xf32> to vector<8x1xf32>
    %12 = vector.broadcast %11 : vector<8x1xf32> to vector<8x32xf32>
    %13 = arith.addf %9, %12 : vector<8x32xf32>
    %cst_10 = arith.constant 0.000000e+00 : f32
    %14 = vector.broadcast %cst_10 : f32 to vector<8x32xf32>
    %15 = arith.cmpf ogt, %13, %14 : vector<8x32xf32>
    %cst_11 = arith.constant 2.000000e-01 : f32
    %16 = vector.broadcast %cst_11 : f32 to vector<8x32xf32>
    %17 = arith.mulf %16, %13 : vector<8x32xf32>
    %18 = arith.select %15, %13, %17 : vector<8x32xi1>, vector<8x32xf32>
    %c0_12 = arith.constant 0 : index
    %c0_13 = arith.constant 0 : index
    %19 = vector.load %arg8[%c0_12, %c0_13] : memref<8x192xf32, #tpu.memory_space<vmem>>, vector<8x32xf32>
    tpu.vector_store %arg8[%c0_12, %c0_13], %18 {strides = array<i32>} : memref<8x192xf32, #tpu.memory_space<vmem>>, vector<8x32xf32>,
    %c0_14 = arith.constant 0 : index
    %c1 = arith.constant 1 : index
    %c0_15 = arith.constant 0 : index
    %c0_16 = arith.constant 0 : index
    %20 = vector.load %arg3[%c0_14, %c1, %c0_15, %c0_16] : memref<1x6x8x24xf32, #tpu.memory_space<vmem>>, vector<1x1x8x24xf32>
    %21 = vector.shape_cast %20 : vector<1x1x8x24xf32> to vector<8x24xf32>
    %22 = vector.extract_strided_slice %5 {offsets = [0, 32], sizes = [24, 32], strides = [1, 1]} : vector<24x192xf32> to vector<24x32xf32>
    %cst_17 = arith.constant dense<0.000000e+00> : vector<8x32xf32>
    %23 = tpu.matmul %21, %22, %cst_17 {dimension_numbers = #tpu.dot_dimension_numbers<[1], [0], [0], [1], [0, 0, 1, 1], [], []>} : vector<8x24xf32>, vector<24x32xf32>, vector<8x32xf32> -> vector<8x32xf32>
    %c0_18 = arith.constant 0 : index
    %c1_19 = arith.constant 1 : index
    %c0_20 = arith.constant 0 : index
    %c0_21 = arith.constant 0 : index
    %24 = vector.load %arg4[%c0_18, %c1_19, %c0_20, %c0_21] : memref<1x6x8x1xf32, #tpu.memory_space<vmem>>, vector<1x1x8x1xf32>
    %25 = vector.shape_cast %24 : vector<1x1x8x1xf32> to vector<8x1xf32>
    %26 = vector.broadcast %25 : vector<8x1xf32> to vector<8x32xf32>
    %27 = arith.addf %23, %26 : vector<8x32xf32>
    %cst_22 = arith.constant 0.000000e+00 : f32
    %28 = vector.broadcast %cst_22 : f32 to vector<8x32xf32>
    %29 = arith.cmpf ogt, %27, %28 : vector<8x32xf32>
    %cst_23 = arith.constant 2.000000e-01 : f32
    %30 = vector.broadcast %cst_23 : f32 to vector<8x32xf32>
    %31 = arith.mulf %30, %27 : vector<8x32xf32>
    %32 = arith.select %29, %27, %31 : vector<8x32xi1>, vector<8x32xf32>
    %c0_24 = arith.constant 0 : index
    %c32 = arith.constant 32 : index
    %33 = vector.load %arg8[%c0_24, %c32] : memref<8x192xf32, #tpu.memory_space<vmem>>, vector<8x32xf32>
    tpu.vector_store %arg8[%c0_24, %c32], %32 {strides = array<i32>} : memref<8x192xf32, #tpu.memory_space<vmem>>, vector<8x32xf32>,
    %c0_25 = arith.constant 0 : index
    %c2 = arith.constant 2 : index
    %c0_26 = arith.constant 0 : index
    %c0_27 = arith.constant 0 : index
    %34 = vector.load %arg3[%c0_25, %c2, %c0_26, %c0_27] : memref<1x6x8x24xf32, #tpu.memory_space<vmem>>, vector<1x1x8x24xf32>
    %35 = vector.shape_cast %34 : vector<1x1x8x24xf32> to vector<8x24xf32>
    %36 = vector.extract_strided_slice %5 {offsets = [0, 64], sizes = [24, 32], strides = [1, 1]} : vector<24x192xf32> to vector<24x32xf32>
    %cst_28 = arith.constant dense<0.000000e+00> : vector<8x32xf32>
    %37 = tpu.matmul %35, %36, %cst_28 {dimension_numbers = #tpu.dot_dimension_numbers<[1], [0], [0], [1], [0, 0, 1, 1], [], []>} : vector<8x24xf32>, vector<24x32xf32>, vector<8x32xf32> -> vector<8x32xf32>
    %c0_29 = arith.constant 0 : index
    %c2_30 = arith.constant 2 : index
    %c0_31 = arith.constant 0 : index
    %c0_32 = arith.constant 0 : index
    %38 = vector.load %arg4[%c0_29, %c2_30, %c0_31, %c0_32] : memref<1x6x8x1xf32, #tpu.memory_space<vmem>>, vector<1x1x8x1xf32>
    %39 = vector.shape_cast %38 : vector<1x1x8x1xf32> to vector<8x1xf32>
    %40 = vector.broadcast %39 : vector<8x1xf32> to vector<8x32xf32>
    %41 = arith.addf %37, %40 : vector<8x32xf32>
    %cst_33 = arith.constant 0.000000e+00 : f32
    %42 = vector.broadcast %cst_33 : f32 to vector<8x32xf32>
    %43 = arith.cmpf ogt, %41, %42 : vector<8x32xf32>
    %cst_34 = arith.constant 2.000000e-01 : f32
    %44 = vector.broadcast %cst_34 : f32 to vector<8x32xf32>
    %45 = arith.mulf %44, %41 : vector<8x32xf32>
    %46 = arith.select %43, %41, %45 : vector<8x32xi1>, vector<8x32xf32>
    %c0_35 = arith.constant 0 : index
    %c64 = arith.constant 64 : index
    %47 = vector.load %arg8[%c0_35, %c64] : memref<8x192xf32, #tpu.memory_space<vmem>>, vector<8x32xf32>
    tpu.vector_store %arg8[%c0_35, %c64], %46 {strides = array<i32>} : memref<8x192xf32, #tpu.memory_space<vmem>>, vector<8x32xf32>,
    %c0_36 = arith.constant 0 : index
    %c3 = arith.constant 3 : index
    %c0_37 = arith.constant 0 : index
    %c0_38 = arith.constant 0 : index
    %48 = vector.load %arg3[%c0_36, %c3, %c0_37, %c0_38] : memref<1x6x8x24xf32, #tpu.memory_space<vmem>>, vector<1x1x8x24xf32>
    %49 = vector.shape_cast %48 : vector<1x1x8x24xf32> to vector<8x24xf32>
    %50 = vector.extract_strided_slice %5 {offsets = [0, 96], sizes = [24, 32], strides = [1, 1]} : vector<24x192xf32> to vector<24x32xf32>
    %cst_39 = arith.constant dense<0.000000e+00> : vector<8x32xf32>
    %51 = tpu.matmul %49, %50, %cst_39 {dimension_numbers = #tpu.dot_dimension_numbers<[1], [0], [0], [1], [0, 0, 1, 1], [], []>} : vector<8x24xf32>, vector<24x32xf32>, vector<8x32xf32> -> vector<8x32xf32>
    %c0_40 = arith.constant 0 : index
    %c3_41 = arith.constant 3 : index
    %c0_42 = arith.constant 0 : index
    %c0_43 = arith.constant 0 : index
    %52 = vector.load %arg4[%c0_40, %c3_41, %c0_42, %c0_43] : memref<1x6x8x1xf32, #tpu.memory_space<vmem>>, vector<1x1x8x1xf32>
    %53 = vector.shape_cast %52 : vector<1x1x8x1xf32> to vector<8x1xf32>
    %54 = vector.broadcast %53 : vector<8x1xf32> to vector<8x32xf32>
    %55 = arith.addf %51, %54 : vector<8x32xf32>
    %cst_44 = arith.constant 0.000000e+00 : f32
    %56 = vector.broadcast %cst_44 : f32 to vector<8x32xf32>
    %57 = arith.cmpf ogt, %55, %56 : vector<8x32xf32>
    %cst_45 = arith.constant 2.000000e-01 : f32
    %58 = vector.broadcast %cst_45 : f32 to vector<8x32xf32>
    %59 = arith.mulf %58, %55 : vector<8x32xf32>
    %60 = arith.select %57, %55, %59 : vector<8x32xi1>, vector<8x32xf32>
    %c0_46 = arith.constant 0 : index
    %c96 = arith.constant 96 : index
    %61 = vector.load %arg8[%c0_46, %c96] : memref<8x192xf32, #tpu.memory_space<vmem>>, vector<8x32xf32>
    tpu.vector_store %arg8[%c0_46, %c96], %60 {strides = array<i32>} : memref<8x192xf32, #tpu.memory_space<vmem>>, vector<8x32xf32>,
    %c0_47 = arith.constant 0 : index
    %c4 = arith.constant 4 : index
    %c0_48 = arith.constant 0 : index
    %c0_49 = arith.constant 0 : index
    %62 = vector.load %arg3[%c0_47, %c4, %c0_48, %c0_49] : memref<1x6x8x24xf32, #tpu.memory_space<vmem>>, vector<1x1x8x24xf32>
    %63 = vector.shape_cast %62 : vector<1x1x8x24xf32> to vector<8x24xf32>
    %64 = vector.extract_strided_slice %5 {offsets = [0, 128], sizes = [24, 32], strides = [1, 1]} : vector<24x192xf32> to vector<24x32xf32>
    %cst_50 = arith.constant dense<0.000000e+00> : vector<8x32xf32>
    %65 = tpu.matmul %63, %64, %cst_50 {dimension_numbers = #tpu.dot_dimension_numbers<[1], [0], [0], [1], [0, 0, 1, 1], [], []>} : vector<8x24xf32>, vector<24x32xf32>, vector<8x32xf32> -> vector<8x32xf32>
    %c0_51 = arith.constant 0 : index
    %c4_52 = arith.constant 4 : index
    %c0_53 = arith.constant 0 : index
    %c0_54 = arith.constant 0 : index
    %66 = vector.load %arg4[%c0_51, %c4_52, %c0_53, %c0_54] : memref<1x6x8x1xf32, #tpu.memory_space<vmem>>, vector<1x1x8x1xf32>
    %67 = vector.shape_cast %66 : vector<1x1x8x1xf32> to vector<8x1xf32>
    %68 = vector.broadcast %67 : vector<8x1xf32> to vector<8x32xf32>
    %69 = arith.addf %65, %68 : vector<8x32xf32>
    %cst_55 = arith.constant 0.000000e+00 : f32
    %70 = vector.broadcast %cst_55 : f32 to vector<8x32xf32>
    %71 = arith.cmpf ogt, %69, %70 : vector<8x32xf32>
    %cst_56 = arith.constant 2.000000e-01 : f32
    %72 = vector.broadcast %cst_56 : f32 to vector<8x32xf32>
    %73 = arith.mulf %72, %69 : vector<8x32xf32>
    %74 = arith.select %71, %69, %73 : vector<8x32xi1>, vector<8x32xf32>
    %c0_57 = arith.constant 0 : index
    %c128 = arith.constant 128 : index
    %75 = vector.load %arg8[%c0_57, %c128] : memref<8x192xf32, #tpu.memory_space<vmem>>, vector<8x32xf32>
    tpu.vector_store %arg8[%c0_57, %c128], %74 {strides = array<i32>} : memref<8x192xf32, #tpu.memory_space<vmem>>, vector<8x32xf32>,
    %c0_58 = arith.constant 0 : index
    %c5 = arith.constant 5 : index
    %c0_59 = arith.constant 0 : index
    %c0_60 = arith.constant 0 : index
    %76 = vector.load %arg3[%c0_58, %c5, %c0_59, %c0_60] : memref<1x6x8x24xf32, #tpu.memory_space<vmem>>, vector<1x1x8x24xf32>
    %77 = vector.shape_cast %76 : vector<1x1x8x24xf32> to vector<8x24xf32>
    %78 = vector.extract_strided_slice %5 {offsets = [0, 160], sizes = [24, 32], strides = [1, 1]} : vector<24x192xf32> to vector<24x32xf32>
    %cst_61 = arith.constant dense<0.000000e+00> : vector<8x32xf32>
    %79 = tpu.matmul %77, %78, %cst_61 {dimension_numbers = #tpu.dot_dimension_numbers<[1], [0], [0], [1], [0, 0, 1, 1], [], []>} : vector<8x24xf32>, vector<24x32xf32>, vector<8x32xf32> -> vector<8x32xf32>
    %c0_62 = arith.constant 0 : index
    %c5_63 = arith.constant 5 : index
    %c0_64 = arith.constant 0 : index
    %c0_65 = arith.constant 0 : index
    %80 = vector.load %arg4[%c0_62, %c5_63, %c0_64, %c0_65] : memref<1x6x8x1xf32, #tpu.memory_space<vmem>>, vector<1x1x8x1xf32>
    %81 = vector.shape_cast %80 : vector<1x1x8x1xf32> to vector<8x1xf32>
    %82 = vector.broadcast %81 : vector<8x1xf32> to vector<8x32xf32>
    %83 = arith.addf %79, %82 : vector<8x32xf32>
    %cst_66 = arith.constant 0.000000e+00 : f32
    %84 = vector.broadcast %cst_66 : f32 to vector<8x32xf32>
    %85 = arith.cmpf ogt, %83, %84 : vector<8x32xf32>
    %cst_67 = arith.constant 2.000000e-01 : f32
    %86 = vector.broadcast %cst_67 : f32 to vector<8x32xf32>
    %87 = arith.mulf %86, %83 : vector<8x32xf32>
    %88 = arith.select %85, %83, %87 : vector<8x32xi1>, vector<8x32xf32>
    %c0_68 = arith.constant 0 : index
    %c160 = arith.constant 160 : index
    %89 = vector.load %arg8[%c0_68, %c160] : memref<8x192xf32, #tpu.memory_space<vmem>>, vector<8x32xf32>
    tpu.vector_store %arg8[%c0_68, %c160], %88 {strides = array<i32>} : memref<8x192xf32, #tpu.memory_space<vmem>>, vector<8x32xf32>,
    %c0_69 = arith.constant 0 : index
    %c30 = arith.constant 30 : index
    %90 = vector.load %arg8[%c0_69, %c30] : memref<8x192xf32, #tpu.memory_space<vmem>>, vector<8x128xf32>
    %c0_70 = arith.constant 0 : index
    %c32_71 = arith.constant 32 : index
    %91 = vector.load %arg8[%c0_70, %c32_71] : memref<8x192xf32, #tpu.memory_space<vmem>>, vector<8x128xf32>
    %c0_72 = arith.constant 0 : index
    %c34 = arith.constant 34 : index
    %92 = vector.load %arg8[%c0_72, %c34] : memref<8x192xf32, #tpu.memory_space<vmem>>, vector<8x128xf32>
    %93 = tpu.concatenate %90, %91, %92 in 0 : vector<8x128xf32>, vector<8x128xf32>, vector<8x128xf32> -> vector<24x128xf32>
    %c0_73 = arith.constant 0 : index
    %c0_74 = arith.constant 0 : index
    %94 = vector.load %arg5[%c0_73, %c0_74] : memref<8x24xf32, #tpu.memory_space<vmem>>, vector<8x24xf32>
    %cst_75 = arith.constant dense<0.000000e+00> : vector<8x128xf32>
    %95 = tpu.matmul %94, %93, %cst_75 {dimension_numbers = #tpu.dot_dimension_numbers<[1], [0], [0], [1], [0, 0, 1, 1], [], []>} : vector<8x24xf32>, vector<24x128xf32>, vector<8x128xf32> -> vector<8x128xf32>
    %c0_76 = arith.constant 0 : index
    %c0_77 = arith.constant 0 : index
    %96 = vector.load %arg6[%c0_76, %c0_77] : memref<8x1xf32, #tpu.memory_space<vmem>>, vector<8x1xf32>
    %97 = vector.broadcast %96 : vector<8x1xf32> to vector<8x128xf32>
    %98 = arith.addf %95, %97 : vector<8x128xf32>
    %cst_78 = arith.constant 0.000000e+00 : f32
    %99 = vector.broadcast %cst_78 : f32 to vector<8x128xf32>
    %100 = arith.cmpf ogt, %98, %99 : vector<8x128xf32>
    %cst_79 = arith.constant 2.000000e-01 : f32
    %101 = vector.broadcast %cst_79 : f32 to vector<8x128xf32>
    %102 = arith.mulf %101, %98 : vector<8x128xf32>
    %103 = arith.select %100, %98, %102 : vector<8x128xi1>, vector<8x128xf32>
    %c0_80 = arith.constant 0 : index
    %c0_81 = arith.constant 0 : index
    %c0_82 = arith.constant 0 : index
    %104 = vector.load %arg7[%c0_80, %c0_81, %c0_82] : memref<1x8x128xf32, #tpu.memory_space<vmem>>, vector<1x8x128xf32>
    %105 = vector.shape_cast %104 : vector<1x8x128xf32> to vector<8x128xf32>
    %106 = vector.shape_cast %103 : vector<8x128xf32> to vector<1x8x128xf32>
    tpu.vector_store %arg7[%c0_80, %c0_81, %c0_82], %106 {strides = array<i32>} : memref<1x8x128xf32, #tpu.memory_space<vmem>>, vector<1x8x128xf32>,
    return
  }
  func.func @transform_0(%arg0: i32, %arg1: i32) -> (i32, i32, i32) {
    %c2_i32 = arith.constant 2 : i32
    %0 = arith.muli %arg0, %c2_i32 : i32
    %1 = arith.addi %0, %arg1 : i32
    %c0_i32 = arith.constant 0 : i32
    %c0_i32_0 = arith.constant 0 : i32
    %c0_i32_1 = arith.constant 0 : i32
    return %1, %c0_i32, %c0_i32_0 : i32, i32, i32
  }
  func.func @transform_1(%arg0: i32, %arg1: i32) -> (i32, i32, i32, i32) {
    %c2_i32 = arith.constant 2 : i32
    %0 = arith.muli %arg0, %c2_i32 : i32
    %1 = arith.addi %0, %arg1 : i32
    %c0_i32 = arith.constant 0 : i32
    %c0_i32_0 = arith.constant 0 : i32
    %c0_i32_1 = arith.constant 0 : i32
    %c0_i32_2 = arith.constant 0 : i32
    return %1, %c0_i32, %c0_i32_0, %c0_i32_1 : i32, i32, i32, i32
  }
  func.func @transform_2(%arg0: i32, %arg1: i32) -> (i32, i32, i32, i32) {
    %c2_i32 = arith.constant 2 : i32
    %0 = arith.muli %arg0, %c2_i32 : i32
    %1 = arith.addi %0, %arg1 : i32
    %c0_i32 = arith.constant 0 : i32
    %c0_i32_0 = arith.constant 0 : i32
    %c0_i32_1 = arith.constant 0 : i32
    %c0_i32_2 = arith.constant 0 : i32
    return %1, %c0_i32, %c0_i32_0, %c0_i32_1 : i32, i32, i32, i32
  }
  func.func @transform_3(%arg0: i32, %arg1: i32) -> (i32, i32) {
    %c0_i32 = arith.constant 0 : i32
    %c0_i32_0 = arith.constant 0 : i32
    %c0_i32_1 = arith.constant 0 : i32
    return %c0_i32, %c0_i32_0 : i32, i32
  }
  func.func @transform_4(%arg0: i32, %arg1: i32) -> (i32, i32) {
    %c0_i32 = arith.constant 0 : i32
    %c0_i32_0 = arith.constant 0 : i32
    %c0_i32_1 = arith.constant 0 : i32
    return %c0_i32, %c0_i32_0 : i32, i32
  }
  func.func @transform_5(%arg0: i32, %arg1: i32) -> (i32, i32, i32) {
    %c0_i32 = arith.constant 0 : i32
    %c0_i32_0 = arith.constant 0 : i32
    return %arg0, %c0_i32, %arg1 : i32, i32, i32
  }
}

</mosaic_0001>

<llo_original>
// kernel: tpu_custom_call.1
$region0: #{tpu_custom_call.1}
  #allocation0 [shape = 'u32[]', space=smem, size = 0x4, offset = 0x4, fixed_abs, tag = 'smem constant byte address 0x4 - core index']
  #allocation1 [shape = 'u32[144,128]{1,0:T(1,128)}', space=vmem, size = 0x12000, scoped, tag = 'internal scratch']
  #allocation2 [shape = 'f32[8,192]{1,0:T(8,128)}', space=vmem, size = 0x2000, scoped, tag = 'scratch operand']
  %s0 = inlined_call_operand.hbm [shape: f32[4,8,194], index: 0, kind: input, shape index: {}]
  %s1 = inlined_call_operand.vmem [shape: f32[4,6,8,24], index: 1, kind: input, shape index: {}]
  %s2 = inlined_call_operand.vmem [shape: f32[4,6,8,1], index: 2, kind: input, shape index: {}]
  %s3 = inlined_call_operand.vmem [shape: f32[8,24], index: 3, kind: input, shape index: {}]
  %s4 = inlined_call_operand.vmem [shape: f32[8,1], index: 4, kind: input, shape index: {}]
  %s5 = inlined_call_operand.hbm [shape: f32[2,8,256], index: 5, kind: output, shape index: {}]
  %s6 = sld [smem:[#allocation0]]
  $region57: #{tpu_custom_call.1} parent=0
    _
  %s8 = ssub.s32 1, %s6
  %s9 = scalar_select 0, %s8, %s6
  $region1: #{tpu_custom_call.1} parent=0
    #allocation3 [shape = 'u8[16384]{0}', space=vmem, size = 0x4000, scoped, tag = 'input window, operand 0']
    #allocation4 [shape = 's32[2]{0}', space=sflag, size = 0x8, scoped, tag = 'scoped memory for tpu_custom_call.1']
    #allocation5 [shape = 's32[2]{0}', space=sflag, size = 0x8, scoped, tag = 'scoped memory for tpu_custom_call.1']
    #allocation6 [shape = 'u8[8192]{0}', space=vmem, size = 0x2000, scoped, tag = 'output window, operand 0']
    %10 = vsyncpa [#allocation4], 0
    %s11 = scalar_lea.sflag [#allocation4], 1
    %12 = vsyncpa %s11, 0
    %13 = vsyncpa [#allocation5], 0
    %s14 = scalar_lea.sflag [#allocation5], 1
    %15 = vsyncpa %s14, 0
    loop: start=0, step=1, limit=6
    $region2: #{tpu_custom_call.1} parent=1 // loop_pre_header
      _
    $region3: #{tpu_custom_call.1} parent=1 // loop_header
      %s17 = sphi 0, %s21
      %p18 = scmp.ge.s32.totalorder %s17, 6
      %s24 = sphi 0, %s36
      %s25 = sphi 0, %s32
      %s26 = sphi 0, %s24
      %s27 = sphi 0, %s25
      %s28 = sphi 0, %s26
      %s29 = sphi 0, %s27
      %s43 = sphi 0, %s45
      %s46 = sphi 0, %s43
      %s47 = sphi 0, %s46
      %s63 = sphi 0, %s47
      %s73 = sphi 0, %s75
      %s76 = sphi 0, %s73
      %s77 = sphi 0, %s76
      %s93 = sphi 0, %s77
      %s103 = sphi 0, %s105
      %s106 = sphi 0, %s103
      %s107 = sphi 0, %s106
      %s123 = sphi 0, %s107
      %s127 = sphi 0, %s127
      %s129 = sphi 0, %s127
      %s130 = sphi 0, %s129
      %s144 = sphi 0, %s130
      %s148 = sphi 0, %s148
      %s150 = sphi 0, %s148
      %s151 = sphi 0, %s150
      %s165 = sphi 0, %s151
      %s173 = sphi 0, %s175
      %s176 = sphi 0, %s173
      %s177 = sphi 0, %s176
      %s193 = sphi 0, %s177
    $region4: #{tpu_custom_call.1} parent=1 // loop_header_branch
      %20 = sbr.rel (%p18) target = $region8
    $region5: #{tpu_custom_call.1} parent=1 // loop_body
      %s22 = ssub.s32 %s17, 1
      %s23 = ssub.s32 %s17, 2
      %s30 = sadd.s32 1, %s25
      %p31 = scmp.ge.s32.totalorder %s30, 2
      %s32 = scalar_select %p31, 0, %s30
      %s33 = sadd.s32 1, %s24
      %s34 = scalar_select %p31, %s33, %s24
      %p35 = scmp.ge.s32.totalorder %s34, 2
      %s36 = scalar_select %p35, 0, %s34
      %s37 = smul.u32 %s24, 2
      %s38 = sadd.s32 %s37, %s25
      %s39 = smul.u32 %s36, 2
      %s40 = sadd.s32 %s39, %s32
      %s41 = ssub.s32 %s38, %s40
      %p42 = scmp.eq.s32.totalorder %s41, 0
      %s44 = sadd.s32 %s43, 1
      %s45 = scalar_select %p42, %s43, %s44
      %p48 = pneg %p42
      %p49 = scmp.eq.s32.totalorder %s17, 3
      %p50 = por %p48, %p49
      %p51 = scmp.ne.s32.totalorder %s43, %s46
      %p52 = scmp.eq.s32.totalorder %s17, 0
      %p53 = por %p51, %p52
      %p54 = scmp.ne.s32.totalorder %s43, %s46
      %p55 = scmp.eq.s32.totalorder %s22, 3
      %p56 = por %p54, %p55
      %p57 = scmp.ne.s32.totalorder %s46, %s47
      %p58 = scmp.eq.s32.totalorder %s22, 0
      %p59 = por %p57, %p58
      %p60 = scmp.ne.s32.totalorder %s46, %s47
      %p61 = scmp.eq.s32.totalorder %s23, 3
      %p62 = por %p60, %p61
      %p64 = scmp.ne.s32.totalorder %s47, %s63
      %p65 = scmp.eq.s32.totalorder %s23, 0
      %p66 = por %p64, %p65
      %s67 = smul.u32 %s24, 2
      %s68 = sadd.s32 %s67, %s25
      %s69 = smul.u32 %s36, 2
      %s70 = sadd.s32 %s69, %s32
      %s71 = ssub.s32 %s68, %s70
      %p72 = scmp.eq.s32.totalorder %s71, 0
      %s74 = sadd.s32 %s73, 1
      %s75 = scalar_select %p72, %s73, %s74
      %p78 = pneg %p72
      %p79 = scmp.eq.s32.totalorder %s17, 3
      %p80 = por %p78, %p79
      %p81 = scmp.ne.s32.totalorder %s73, %s76
      %p82 = scmp.eq.s32.totalorder %s17, 0
      %p83 = por %p81, %p82
      %p84 = scmp.ne.s32.totalorder %s73, %s76
      %p85 = scmp.eq.s32.totalorder %s22, 3
      %p86 = por %p84, %p85
      %p87 = scmp.ne.s32.totalorder %s76, %s77
      %p88 = scmp.eq.s32.totalorder %s22, 0
      %p89 = por %p87, %p88
      %p90 = scmp.ne.s32.totalorder %s76, %s77
      %p91 = scmp.eq.s32.totalorder %s23, 3
      %p92 = por %p90, %p91
      %p94 = scmp.ne.s32.totalorder %s77, %s93
      %p95 = scmp.eq.s32.totalorder %s23, 0
      %p96 = por %p94, %p95
      %s97 = smul.u32 %s24, 2
      %s98 = sadd.s32 %s97, %s25
      %s99 = smul.u32 %s36, 2
      %s100 = sadd.s32 %s99, %s32
      %s101 = ssub.s32 %s98, %s100
      %p102 = scmp.eq.s32.totalorder %s101, 0
      %s104 = sadd.s32 %s103, 1
      %s105 = scalar_select %p102, %s103, %s104
      %p108 = pneg %p102
      %p109 = scmp.eq.s32.totalorder %s17, 3
      %p110 = por %p108, %p109
      %p111 = scmp.ne.s32.totalorder %s103, %s106
      %p112 = scmp.eq.s32.totalorder %s17, 0
      %p113 = por %p111, %p112
      %p114 = scmp.ne.s32.totalorder %s103, %s106
      %p115 = scmp.eq.s32.totalorder %s22, 3
      %p116 = por %p114, %p115
      %p117 = scmp.ne.s32.totalorder %s106, %s107
      %p118 = scmp.eq.s32.totalorder %s22, 0
      %p119 = por %p117, %p118
      %p120 = scmp.ne.s32.totalorder %s106, %s107
      %p121 = scmp.eq.s32.totalorder %s23, 3
      %p122 = por %p120, %p121
      %p124 = scmp.ne.s32.totalorder %s107, %s123
      %p125 = scmp.eq.s32.totalorder %s23, 0
      %p126 = por %p124, %p125
      %s128 = sadd.s32 %s127, 1
      %p131 = scmp.eq.s32.totalorder %s17, 3
      %p132 = scmp.ne.s32.totalorder %s127, %s129
      %p133 = scmp.eq.s32.totalorder %s17, 0
      %p134 = por %p132, %p133
      %p135 = scmp.ne.s32.totalorder %s127, %s129
      %p136 = scmp.eq.s32.totalorder %s22, 3
      %p137 = por %p135, %p136
      %p138 = scmp.ne.s32.totalorder %s129, %s130
      %p139 = scmp.eq.s32.totalorder %s22, 0
      %p140 = por %p138, %p139
      %p141 = scmp.ne.s32.totalorder %s129, %s130
      %p142 = scmp.eq.s32.totalorder %s23, 3
      %p143 = por %p141, %p142
      %p145 = scmp.ne.s32.totalorder %s130, %s144
      %p146 = scmp.eq.s32.totalorder %s23, 0
      %p147 = por %p145, %p146
      %s149 = sadd.s32 %s148, 1
      %p152 = scmp.eq.s32.totalorder %s17, 3
      %p153 = scmp.ne.s32.totalorder %s148, %s150
      %p154 = scmp.eq.s32.totalorder %s17, 0
      %p155 = por %p153, %p154
      %p156 = scmp.ne.s32.totalorder %s148, %s150
      %p157 = scmp.eq.s32.totalorder %s22, 3
      %p158 = por %p156, %p157
      %p159 = scmp.ne.s32.totalorder %s150, %s151
      %p160 = scmp.eq.s32.totalorder %s22, 0
      %p161 = por %p159, %p160
      %p162 = scmp.ne.s32.totalorder %s150, %s151
      %p163 = scmp.eq.s32.totalorder %s23, 3
      %p164 = por %p162, %p163
      %p166 = scmp.ne.s32.totalorder %s151, %s165
      %p167 = scmp.eq.s32.totalorder %s23, 0
      %p168 = por %p166, %p167
      %s169 = ssub.s32 %s24, %s36
      %s170 = ssub.s32 %s25, %s32
      %s171 = sor.u32 %s169, %s170
      %p172 = scmp.eq.s32.totalorder %s171, 0
      %s174 = sadd.s32 %s173, 1
      %s175 = scalar_select %p172, %s173, %s174
      %p178 = pneg %p172
      %p179 = scmp.eq.s32.totalorder %s17, 3
      %p180 = por %p178, %p179
      %p181 = scmp.ne.s32.totalorder %s173, %s176
      %p182 = scmp.eq.s32.totalorder %s17, 0
      %p183 = por %p181, %p182
      %p184 = scmp.ne.s32.totalorder %s173, %s176
      %p185 = scmp.eq.s32.totalorder %s22, 3
      %p186 = por %p184, %p185
      %p187 = scmp.ne.s32.totalorder %s176, %s177
      %p188 = scmp.eq.s32.totalorder %s22, 0
      %p189 = por %p187, %p188
      %p190 = scmp.ne.s32.totalorder %s176, %s177
      %p191 = scmp.eq.s32.totalorder %s23, 3
      %p192 = por %p190, %p191
      %p194 = scmp.ne.s32.totalorder %s177, %s193
      %p195 = scmp.eq.s32.totalorder %s23, 0
      %p196 = por %p194, %p195
      %p197 = scmp.le.s32.totalorder 1, %s17
      %p198 = scmp.lt.s32.totalorder %s17, 5
      %p199 = pnand %p197, %p198
      %p200 = pneg %p199
      // Predicated region
      $region9: #{tpu_custom_call.1} parent=5 // pred_check
        _
      $region10: #{tpu_custom_call.1} parent=5 // pred_check_branch
        %202 = sbr.rel (%p199) target = $region12
      $region11: #{tpu_custom_call.1} parent=5 // pred_region
        %s203 = ssub.s32 %s17, 1
        // Predicated region
        $region13: #{tpu_custom_call.1} parent=11 // pred_check
          %p204 = pneg %p140
        $region14: #{tpu_custom_call.1} parent=11 // pred_check_branch
          %206 = sbr.rel (%p204) target = $region16
        $region15: #{tpu_custom_call.1} parent=11 // pred_region
          _
        $region16: #{tpu_custom_call.1} parent=11 // pred_fallthru
          _
        // Predicated region
        $region17: #{tpu_custom_call.1} parent=11 // pred_check
          %p207 = pneg %p161
        $region18: #{tpu_custom_call.1} parent=11 // pred_check_branch
          %209 = sbr.rel (%p207) target = $region20
        $region19: #{tpu_custom_call.1} parent=11 // pred_region
          _
        $region20: #{tpu_custom_call.1} parent=11 // pred_fallthru
          _
      $region12: #{tpu_custom_call.1} parent=5 // pred_fallthru
        _
      %p210 = scmp.lt.s32.totalorder %s17, 4
      // Predicated region
      $region21: #{tpu_custom_call.1} parent=5 // pred_check
        %p211 = pneg %p210
      $region22: #{tpu_custom_call.1} parent=5 // pred_check_branch
        %213 = sbr.rel (%p211) target = $region24
      $region23: #{tpu_custom_call.1} parent=5 // pred_region
        // Predicated region
        $region25: #{tpu_custom_call.1} parent=23 // pred_check
          %p214 = pneg %p53
        $region26: #{tpu_custom_call.1} parent=23 // pred_check_branch
          %216 = sbr.rel (%p214) target = $region28
        $region27: #{tpu_custom_call.1} parent=23 // pred_region
          %s217 = sand.u32 %s43, 1
          %s218 = scalar_lea.sflag [#allocation4], %s217
          %s219 = sand.u32 %s43, 1
          %s220 = smul.addr %s219, 16
          %s221 = scalar_lea.vmem [#allocation3], %s220
          %s222 = smul.u32 %s24, 2
          %s223 = sadd.s32 %s222, %s25
          %s225 = ssub.s32 256, 256
          %226 = vsyncadd %s218, %s225
          %s227 = smul.addr %s223, 2
          %s228 = smul.addr %s227, 128
          %s229 = scalar_lea.hbm %s0, %s228
          %s231 = sshll.u32 %s221, 4
          %s232 = int_to_ptr.vmem [resolvable:$true] %s231
          %234 = dma.hbm_to_vmem [thread:$0]  %s229, 256, %s232, %s218
        $region28: #{tpu_custom_call.1} parent=23 // pred_fallthru
          _
        // Predicated region
        $region29: #{tpu_custom_call.1} parent=23 // pred_check
          %p235 = pneg %p83
        $region30: #{tpu_custom_call.1} parent=23 // pred_check_branch
          %237 = sbr.rel (%p235) target = $region32
        $region31: #{tpu_custom_call.1} parent=23 // pred_region
          %s238 = smul.u32 %s24, 2
          %s239 = sadd.s32 %s238, %s25
          %p240 = scmp.lt.s32.totalorder %s239, 3
          %s241 = scalar_select %p240, %s239, 3
          %s242 = smul.addr %s241, 6
          %s243 = smul.addr %s242, 8
          %s244 = scalar_lea.vmem %s1, %s243
          %s245 = smul.u32 %s24, 2
          %s246 = sadd.s32 %s245, %s25
        $region32: #{tpu_custom_call.1} parent=23 // pred_fallthru
          _
        // Predicated region
        $region33: #{tpu_custom_call.1} parent=23 // pred_check
          %p247 = pneg %p113
        $region34: #{tpu_custom_call.1} parent=23 // pred_check_branch
          %249 = sbr.rel (%p247) target = $region36
        $region35: #{tpu_custom_call.1} parent=23 // pred_region
          %s250 = smul.u32 %s24, 2
          %s251 = sadd.s32 %s250, %s25
          %p252 = scmp.lt.s32.totalorder %s251, 3
          %s253 = scalar_select %p252, %s251, 3
          %s254 = smul.addr %s253, 6
          %s255 = smul.addr %s254, 8
          %s256 = scalar_lea.vmem %s2, %s255
          %s257 = smul.u32 %s24, 2
          %s258 = sadd.s32 %s257, %s25
        $region36: #{tpu_custom_call.1} parent=23 // pred_fallthru
          _
      $region24: #{tpu_custom_call.1} parent=5 // pred_fallthru
        _
      %p259 = scmp.le.s32.totalorder 1, %s17
      %p260 = scmp.lt.s32.totalorder %s17, 5
      %p261 = pnand %p259, %p260
      %p262 = pneg %p261
      // Predicated region
      $region37: #{tpu_custom_call.1} parent=5 // pred_check
        _
      $region38: #{tpu_custom_call.1} parent=5 // pred_check_branch
        %264 = sbr.rel (%p261) target = $region40
      $region39: #{tpu_custom_call.1} parent=5 // pred_region
        %s265 = ssub.s32 %s17, 1
        %s266 = sand.u32 %s46, 1
        %s267 = scalar_lea.sflag [#allocation4], %s266
        %s268 = sand.u32 %s46, 1
        %s269 = smul.addr %s268, 16
        %s270 = scalar_lea.vmem [#allocation3], %s269
        // Predicated region
        $region41: #{tpu_custom_call.1} parent=39 // pred_check
          %p271 = pneg %p59
        $region42: #{tpu_custom_call.1} parent=39 // pred_check_branch
          %273 = sbr.rel (%p271) target = $region44
        $region43: #{tpu_custom_call.1} parent=39 // pred_region
          %274 = dma.done %s267, 256
        $region44: #{tpu_custom_call.1} parent=39 // pred_fallthru
          _
        %s275 = sand.u32 %s46, 1
        %s276 = scalar_lea.sflag [#allocation4], %s275
        %s277 = sand.u32 %s46, 1
        %s278 = smul.addr %s277, 16
        %s279 = scalar_lea.vmem [#allocation3], %s278
        %p280 = pneg %p59
        %p281 = pneg %p56
        %s282 = smul.u32 %s26, 2
        %s283 = sadd.s32 %s282, %s27
        %p284 = scmp.lt.s32.totalorder %s283, 3
        %s285 = scalar_select %p284, %s283, 3
        %s286 = smul.addr %s285, 6
        %s287 = smul.addr %s286, 8
        %s288 = scalar_lea.vmem %s1, %s287
        %p289 = pneg %p89
        %p290 = pneg %p86
        %s291 = smul.u32 %s26, 2
        %s292 = sadd.s32 %s291, %s27
        %p293 = scmp.lt.s32.totalorder %s292, 3
        %s294 = scalar_select %p293, %s292, 3
        %s295 = smul.addr %s294, 6
        %s296 = smul.addr %s295, 8
        %s297 = scalar_lea.vmem %s2, %s296
        %p298 = pneg %p119
        %p299 = pneg %p116
        %p300 = pneg %p140
        %p301 = pneg %p137
        %p302 = pneg %p161
        %p303 = pneg %p158
        %p304 = pneg %p189
        %p305 = pneg %p186
        %s306 = sand.u32 %s176, 1
        %s307 = scalar_lea.sflag [#allocation5], %s306
        %s308 = sand.u32 %s176, 1
        %s309 = smul.addr %s308, 8
        %s310 = scalar_lea.vmem [#allocation6], %s309
        %s311 = smul.u32 %s26, 2
        %s312 = sadd.s32 %s311, %s27
        %s313 = smul.u32 %s26, 2
        %s314 = sadd.s32 %s313, %s27
        %p315 = scmp.lt.s32.totalorder %s314, 3
        %s316 = scalar_select %p315, %s314, 3
        %s317 = smul.addr %s316, 6
        %s318 = smul.addr %s317, 8
        %s319 = scalar_lea.vmem %s1, %s318
        %s320 = smul.u32 %s26, 2
        %s321 = sadd.s32 %s320, %s27
        %s322 = smul.u32 %s26, 2
        %s323 = sadd.s32 %s322, %s27
        %p324 = scmp.lt.s32.totalorder %s323, 3
        %s325 = scalar_select %p324, %s323, 3
        %s326 = smul.addr %s325, 6
        %s327 = smul.addr %s326, 8
        %s328 = scalar_lea.vmem %s2, %s327
        %s329 = smul.u32 %s26, 2
        %s330 = sadd.s32 %s329, %s27
        %v331 = vld [vmem:[%s270] sm:$0xff]
        %v332 = vld [vmem:[%s270 + $0x8] sm:$0xff]
        %335 = vrot.lane.b32.xlu0 %v331, 127
        %v336 = vpop.permute.xlu0 %335
        %337 = vrot.lane.b32.xlu0 %v332, 127
        %v338 = vpop.permute.xlu0 %337
        %vm339 = vcmask 1039360
        %v340 = vsel %vm339, %v336, %v338
        %343 = vrot.lane.b32.xlu0 %v331, 126
        %v344 = vpop.permute.xlu0 %343
        %345 = vrot.lane.b32.xlu0 %v332, 126
        %v346 = vpop.permute.xlu0 %345
        %vm347 = vcmask 1031168
        %v348 = vsel %vm347, %v344, %v346
        %v351 = vld [vmem:[%s319] sm:$0xff]
        %v352 = vld [vmem:[%s328] sm:$0xff]
        %354 = vset.pattern.permute.xlu0 0
        %355 = vperm.xlu0 %354, %v352
        %v356 = vpop.permute.xlu0 %355
        %vm358 = vcmask 195584
        %v360 = vsel %vm358, %v351, 0
        %362 = vmatprep.subr.mxu0 0.0
        %363 = vmatpush1.msra.mxu0 %v331
        %364 = vmatprep.subr.mxu0 0.0
        %365 = vmatpush1.msra.mxu0 %v340
        %366 = vmatprep.subr.mxu0 0.0
        %367 = vmatpush1.msra.mxu0 %v348
        %368 = vmatprep.subr.mxu0 0.0
        %369 = vmatpush1.msra.mxu0 0.0
        %370 = vmatprep.subr.mxu0 0.0
        %371 = vmatpush1.msra.mxu0 0.0
        %372 = vmatprep.subr.mxu0 0.0
        %373 = vmatpush1.msra.mxu0 0.0
        %374 = vmatprep.subr.mxu0 0.0
        %375 = vmatpush1.msra.mxu0 0.0
        %376 = vmatprep.subr.mxu0 0.0
        %377 = vmatpush1.msra.mxu0 0.0
        %378 = vmatprep.subr.mxu0 0.0
        %379 = vmatpush1.msra.mxu0 0.0
        %380 = vmatprep.subr.mxu0 0.0
        %381 = vmatpush1.msra.mxu0 0.0
        %382 = vmatprep.subr.mxu0 0.0
        %383 = vmatpush1.msra.mxu0 0.0
        %384 = vmatprep.subr.mxu0 0.0
        %385 = vmatpush1.msra.mxu0 0.0
        %386 = vmatprep.subr.mxu0 0.0
        %387 = vmatpush1.msra.mxu0 0.0
        %388 = vmatprep.subr.mxu0 0.0
        %389 = vmatpush1.msra.mxu0 0.0
        %390 = vmatprep.subr.mxu0 0.0
        %391 = vmatpush1.msra.mxu0 0.0
        %392 = vmatprep.subr.mxu0 0.0
        %393 = vmatpush1.msra.mxu0 0.0
        %394 = vmatprep.subr.mxu0 0.0
        %395 = vmatpush1.msra.mxu0 0.0
        %396 = vmatprep.subr.mxu0 0.0
        %397 = vmatpush1.msra.mxu0 0.0
        %398 = vmatprep.subr.mxu0 0.0
        %399 = vmatpush1.msra.mxu0 0.0
        %400 = vmatprep.subr.mxu0 0.0
        %401 = vmatpush1.msra.mxu0 0.0
        %402 = vmatprep.subr.mxu0 0.0
        %403 = vmatpush1.msra.mxu0 0.0
        %404 = vmatprep.subr.mxu0 0.0
        %405 = vmatpush1.msra.mxu0 0.0
        %406 = vmatprep.subr.mxu0 0.0
        %407 = vmatpush1.msra.mxu0 0.0
        %408 = vmatprep.subr.mxu0 0.0
        %409 = vmatpush1.msra.mxu0 0.0
        %410 = vmatprep.subr.mxu0 0.0
        %411 = vmatpush1.msra.mxu0 0.0
        %412 = vmatprep.subr.mxu0 0.0
        %413 = vmatpush1.msra.mxu0 0.0
        %414 = vmatprep.subr.mxu0 0.0
        %415 = vmatpush1.msra.mxu0 0.0
        %416 = vmatprep.subr.mxu0 0.0
        %417 = vmatpush1.msra.mxu0 0.0
        %418 = vmatprep.subr.mxu0 0.0
        %419 = vmatpush1.msra.mxu0 0.0
        %420 = vmatprep.subr.mxu0 0.0
        %421 = vmatpush1.msra.mxu0 0.0
        %422 = vmatprep.subr.mxu0 0.0
        %423 = vmatpush1.msra.mxu0 0.0
        %424 = vmatprep.subr.mxu0 0.0
        %425 = vmatpush1.msra.mxu0 0.0
        %426 = vmatprep.mubr.f32.mxu0 0.0
        %427 = vmatmul.mubr.f32.gmra.mrb[0].mxu0 %v360
        %v428 = vpop.f32.mrb[0].mxu0
        %v429 = vadd.f32 %v356, %v428
        %v430 = vpop.f32.mrb[0].mxu0
        %431 = vdwg.mxu0
        %vm432 = vcmp.gt.f32.partialorder %v429, 0.0
        %v433 = vmul.f32 %v429, 0.2
        %v434 = vsel %vm432, %v429, %v433
        %vm435 = vcmask 261120
        %436 = vst.msk [vmem:[#allocation2] sm:$0xff] %vm435, %v434
        %s437 = scalar_lea.vmem %s319, 8
        %v438 = vld [vmem:[%s437] sm:$0xff]
        %s439 = scalar_lea.vmem %s328, 8
        %v440 = vld [vmem:[%s439] sm:$0xff]
        %442 = vset.pattern.permute.xlu0 0
        %443 = vperm.xlu0 %442, %v440
        %v444 = vpop.permute.xlu0 %443
        %446 = vrot.lane.b32.xlu0 %v331, 96
        %v447 = vpop.permute.xlu0 %446
        %448 = vrot.lane.b32.xlu0 %v340, 96
        %v449 = vpop.permute.xlu0 %448
        %450 = vrot.lane.b32.xlu0 %v348, 96
        %v451 = vpop.permute.xlu0 %450
        %v456 = vsel %vm358, %v438, 0
        %458 = vmatprep.subr.mxu0 0.0
        %459 = vmatpush1.msra.mxu0 %v447
        %460 = vmatprep.subr.mxu0 0.0
        %461 = vmatpush1.msra.mxu0 %v449
        %462 = vmatprep.subr.mxu0 0.0
        %463 = vmatpush1.msra.mxu0 %v451
        %464 = vmatprep.subr.mxu0 0.0
        %465 = vmatpush1.msra.mxu0 0.0
        %466 = vmatprep.subr.mxu0 0.0
        %467 = vmatpush1.msra.mxu0 0.0
        %468 = vmatprep.subr.mxu0 0.0
        %469 = vmatpush1.msra.mxu0 0.0
        %470 = vmatprep.subr.mxu0 0.0
        %471 = vmatpush1.msra.mxu0 0.0
        %472 = vmatprep.subr.mxu0 0.0
        %473 = vmatpush1.msra.mxu0 0.0
        %474 = vmatprep.subr.mxu0 0.0
        %475 = vmatpush1.msra.mxu0 0.0
        %476 = vmatprep.subr.mxu0 0.0
        %477 = vmatpush1.msra.mxu0 0.0
        %478 = vmatprep.subr.mxu0 0.0
        %479 = vmatpush1.msra.mxu0 0.0
        %480 = vmatprep.subr.mxu0 0.0
        %481 = vmatpush1.msra.mxu0 0.0
        %482 = vmatprep.subr.mxu0 0.0
        %483 = vmatpush1.msra.mxu0 0.0
        %484 = vmatprep.subr.mxu0 0.0
        %485 = vmatpush1.msra.mxu0 0.0
        %486 = vmatprep.subr.mxu0 0.0
        %487 = vmatpush1.msra.mxu0 0.0
        %488 = vmatprep.subr.mxu0 0.0
        %489 = vmatpush1.msra.mxu0 0.0
        %490 = vmatprep.subr.mxu0 0.0
        %491 = vmatpush1.msra.mxu0 0.0
        %492 = vmatprep.subr.mxu0 0.0
        %493 = vmatpush1.msra.mxu0 0.0
        %494 = vmatprep.subr.mxu0 0.0
        %495 = vmatpush1.msra.mxu0 0.0
        %496 = vmatprep.subr.mxu0 0.0
        %497 = vmatpush1.msra.mxu0 0.0
        %498 = vmatprep.subr.mxu0 0.0
        %499 = vmatpush1.msra.mxu0 0.0
        %500 = vmatprep.subr.mxu0 0.0
        %501 = vmatpush1.msra.mxu0 0.0
        %502 = vmatprep.subr.mxu0 0.0
        %503 = vmatpush1.msra.mxu0 0.0
        %504 = vmatprep.subr.mxu0 0.0
        %505 = vmatpush1.msra.mxu0 0.0
        %506 = vmatprep.subr.mxu0 0.0
        %507 = vmatpush1.msra.mxu0 0.0
        %508 = vmatprep.subr.mxu0 0.0
        %509 = vmatpush1.msra.mxu0 0.0
        %510 = vmatprep.subr.mxu0 0.0
        %511 = vmatpush1.msra.mxu0 0.0
        %512 = vmatprep.subr.mxu0 0.0
        %513 = vmatpush1.msra.mxu0 0.0
        %514 = vmatprep.subr.mxu0 0.0
        %515 = vmatpush1.msra.mxu0 0.0
        %516 = vmatprep.subr.mxu0 0.0
        %517 = vmatpush1.msra.mxu0 0.0
        %518 = vmatprep.subr.mxu0 0.0
        %519 = vmatpush1.msra.mxu0 0.0
        %520 = vmatprep.subr.mxu0 0.0
        %521 = vmatpush1.msra.mxu0 0.0
        %522 = vmatprep.mubr.f32.mxu0 0.0
        %523 = vmatmul.mubr.f32.gmra.mrb[0].mxu0 %v456
        %v524 = vpop.f32.mrb[0].mxu0
        %v525 = vadd.f32 %v444, %v524
        %v526 = vpop.f32.mrb[0].mxu0
        %527 = vdwg.mxu0
        %vm528 = vcmp.gt.f32.partialorder %v525, 0.0
        %v529 = vmul.f32 %v525, 0.2
        %v530 = vsel %vm528, %v525, %v529
        %532 = vrot.lane.b32.xlu0 %v530, 32
        %v533 = vpop.permute.xlu0 %532
        %vm535 = vcmask 523520
        %536 = vst.msk [vmem:[#allocation2] sm:$0xff] %vm535, %v533
        %s537 = scalar_lea.vmem %s319, 16
        %v538 = vld [vmem:[%s537] sm:$0xff]
        %s539 = scalar_lea.vmem %s328, 16
        %v540 = vld [vmem:[%s539] sm:$0xff]
        %542 = vset.pattern.permute.xlu0 0
        %543 = vperm.xlu0 %542, %v540
        %v544 = vpop.permute.xlu0 %543
        %546 = vrot.lane.b32.xlu0 %v331, 64
        %v547 = vpop.permute.xlu0 %546
        %548 = vrot.lane.b32.xlu0 %v340, 64
        %v549 = vpop.permute.xlu0 %548
        %550 = vrot.lane.b32.xlu0 %v348, 64
        %v551 = vpop.permute.xlu0 %550
        %v556 = vsel %vm358, %v538, 0
        %558 = vmatprep.subr.mxu0 0.0
        %559 = vmatpush1.msra.mxu0 %v547
        %560 = vmatprep.subr.mxu0 0.0
        %561 = vmatpush1.msra.mxu0 %v549
        %562 = vmatprep.subr.mxu0 0.0
        %563 = vmatpush1.msra.mxu0 %v551
        %564 = vmatprep.subr.mxu0 0.0
        %565 = vmatpush1.msra.mxu0 0.0
        %566 = vmatprep.subr.mxu0 0.0
        %567 = vmatpush1.msra.mxu0 0.0
        %568 = vmatprep.subr.mxu0 0.0
        %569 = vmatpush1.msra.mxu0 0.0
        %570 = vmatprep.subr.mxu0 0.0
        %571 = vmatpush1.msra.mxu0 0.0
        %572 = vmatprep.subr.mxu0 0.0
        %573 = vmatpush1.msra.mxu0 0.0
        %574 = vmatprep.subr.mxu0 0.0
        %575 = vmatpush1.msra.mxu0 0.0
        %576 = vmatprep.subr.mxu0 0.0
        %577 = vmatpush1.msra.mxu0 0.0
        %578 = vmatprep.subr.mxu0 0.0
        %579 = vmatpush1.msra.mxu0 0.0
        %580 = vmatprep.subr.mxu0 0.0
        %581 = vmatpush1.msra.mxu0 0.0
        %582 = vmatprep.subr.mxu0 0.0
        %583 = vmatpush1.msra.mxu0 0.0
        %584 = vmatprep.subr.mxu0 0.0
        %585 = vmatpush1.msra.mxu0 0.0
        %586 = vmatprep.subr.mxu0 0.0
        %587 = vmatpush1.msra.mxu0 0.0
        %588 = vmatprep.subr.mxu0 0.0
        %589 = vmatpush1.msra.mxu0 0.0
        %590 = vmatprep.subr.mxu0 0.0
        %591 = vmatpush1.msra.mxu0 0.0
        %592 = vmatprep.subr.mxu0 0.0
        %593 = vmatpush1.msra.mxu0 0.0
        %594 = vmatprep.subr.mxu0 0.0
        %595 = vmatpush1.msra.mxu0 0.0
        %596 = vmatprep.subr.mxu0 0.0
        %597 = vmatpush1.msra.mxu0 0.0
        %598 = vmatprep.subr.mxu0 0.0
        %599 = vmatpush1.msra.mxu0 0.0
        %600 = vmatprep.subr.mxu0 0.0
        %601 = vmatpush1.msra.mxu0 0.0
        %602 = vmatprep.subr.mxu0 0.0
        %603 = vmatpush1.msra.mxu0 0.0
        %604 = vmatprep.subr.mxu0 0.0
        %605 = vmatpush1.msra.mxu0 0.0
        %606 = vmatprep.subr.mxu0 0.0
        %607 = vmatpush1.msra.mxu0 0.0
        %608 = vmatprep.subr.mxu0 0.0
        %609 = vmatpush1.msra.mxu0 0.0
        %610 = vmatprep.subr.mxu0 0.0
        %611 = vmatpush1.msra.mxu0 0.0
        %612 = vmatprep.subr.mxu0 0.0
        %613 = vmatpush1.msra.mxu0 0.0
        %614 = vmatprep.subr.mxu0 0.0
        %615 = vmatpush1.msra.mxu0 0.0
        %616 = vmatprep.subr.mxu0 0.0
        %617 = vmatpush1.msra.mxu0 0.0
        %618 = vmatprep.subr.mxu0 0.0
        %619 = vmatpush1.msra.mxu0 0.0
        %620 = vmatprep.subr.mxu0 0.0
        %621 = vmatpush1.msra.mxu0 0.0
        %622 = vmatprep.mubr.f32.mxu0 0.0
        %623 = vmatmul.mubr.f32.gmra.mrb[0].mxu0 %v556
        %v624 = vpop.f32.mrb[0].mxu0
        %v625 = vadd.f32 %v544, %v624
        %v626 = vpop.f32.mrb[0].mxu0
        %627 = vdwg.mxu0
        %vm628 = vcmp.gt.f32.partialorder %v625, 0.0
        %v629 = vmul.f32 %v625, 0.2
        %v630 = vsel %vm628, %v625, %v629
        %632 = vrot.lane.b32.xlu0 %v630, 64
        %v633 = vpop.permute.xlu0 %632
        %vm635 = vcmask 785920
        %636 = vst.msk [vmem:[#allocation2] sm:$0xff] %vm635, %v633
        %s637 = scalar_lea.vmem %s319, 24
        %v638 = vld [vmem:[%s637] sm:$0xff]
        %s639 = scalar_lea.vmem %s328, 24
        %v640 = vld [vmem:[%s639] sm:$0xff]
        %642 = vset.pattern.permute.xlu0 0
        %643 = vperm.xlu0 %642, %v640
        %v644 = vpop.permute.xlu0 %643
        %646 = vrot.lane.b32.xlu0 %v331, 32
        %v647 = vpop.permute.xlu0 %646
        %648 = vrot.lane.b32.xlu0 %v340, 32
        %v649 = vpop.permute.xlu0 %648
        %650 = vrot.lane.b32.xlu0 %v348, 32
        %v651 = vpop.permute.xlu0 %650
        %v656 = vsel %vm358, %v638, 0
        %658 = vmatprep.subr.mxu0 0.0
        %659 = vmatpush1.msra.mxu0 %v647
        %660 = vmatprep.subr.mxu0 0.0
        %661 = vmatpush1.msra.mxu0 %v649
        %662 = vmatprep.subr.mxu0 0.0
        %663 = vmatpush1.msra.mxu0 %v651
        %664 = vmatprep.subr.mxu0 0.0
        %665 = vmatpush1.msra.mxu0 0.0
        %666 = vmatprep.subr.mxu0 0.0
        %667 = vmatpush1.msra.mxu0 0.0
        %668 = vmatprep.subr.mxu0 0.0
        %669 = vmatpush1.msra.mxu0 0.0
        %670 = vmatprep.subr.mxu0 0.0
        %671 = vmatpush1.msra.mxu0 0.0
        %672 = vmatprep.subr.mxu0 0.0
        %673 = vmatpush1.msra.mxu0 0.0
        %674 = vmatprep.subr.mxu0 0.0
        %675 = vmatpush1.msra.mxu0 0.0
        %676 = vmatprep.subr.mxu0 0.0
        %677 = vmatpush1.msra.mxu0 0.0
        %678 = vmatprep.subr.mxu0 0.0
        %679 = vmatpush1.msra.mxu0 0.0
        %680 = vmatprep.subr.mxu0 0.0
        %681 = vmatpush1.msra.mxu0 0.0
        %682 = vmatprep.subr.mxu0 0.0
        %683 = vmatpush1.msra.mxu0 0.0
        %684 = vmatprep.subr.mxu0 0.0
        %685 = vmatpush1.msra.mxu0 0.0
        %686 = vmatprep.subr.mxu0 0.0
        %687 = vmatpush1.msra.mxu0 0.0
        %688 = vmatprep.subr.mxu0 0.0
        %689 = vmatpush1.msra.mxu0 0.0
        %690 = vmatprep.subr.mxu0 0.0
        %691 = vmatpush1.msra.mxu0 0.0
        %692 = vmatprep.subr.mxu0 0.0
        %693 = vmatpush1.msra.mxu0 0.0
        %694 = vmatprep.subr.mxu0 0.0
        %695 = vmatpush1.msra.mxu0 0.0
        %696 = vmatprep.subr.mxu0 0.0
        %697 = vmatpush1.msra.mxu0 0.0
        %698 = vmatprep.subr.mxu0 0.0
        %699 = vmatpush1.msra.mxu0 0.0
        %700 = vmatprep.subr.mxu0 0.0
        %701 = vmatpush1.msra.mxu0 0.0
        %702 = vmatprep.subr.mxu0 0.0
        %703 = vmatpush1.msra.mxu0 0.0
        %704 = vmatprep.subr.mxu0 0.0
        %705 = vmatpush1.msra.mxu0 0.0
        %706 = vmatprep.subr.mxu0 0.0
        %707 = vmatpush1.msra.mxu0 0.0
        %708 = vmatprep.subr.mxu0 0.0
        %709 = vmatpush1.msra.mxu0 0.0
        %710 = vmatprep.subr.mxu0 0.0
        %711 = vmatpush1.msra.mxu0 0.0
        %712 = vmatprep.subr.mxu0 0.0
        %713 = vmatpush1.msra.mxu0 0.0
        %714 = vmatprep.subr.mxu0 0.0
        %715 = vmatpush1.msra.mxu0 0.0
        %716 = vmatprep.subr.mxu0 0.0
        %717 = vmatpush1.msra.mxu0 0.0
        %718 = vmatprep.subr.mxu0 0.0
        %719 = vmatpush1.msra.mxu0 0.0
        %720 = vmatprep.subr.mxu0 0.0
        %721 = vmatpush1.msra.mxu0 0.0
        %722 = vmatprep.mubr.f32.mxu0 0.0
        %723 = vmatmul.mubr.f32.gmra.mrb[0].mxu0 %v656
        %v724 = vpop.f32.mrb[0].mxu0
        %v725 = vadd.f32 %v644, %v724
        %v726 = vpop.f32.mrb[0].mxu0
        %727 = vdwg.mxu0
        %vm728 = vcmp.gt.f32.partialorder %v725, 0.0
        %v729 = vmul.f32 %v725, 0.2
        %v730 = vsel %vm728, %v725, %v729
        %732 = vrot.lane.b32.xlu0 %v730, 96
        %v733 = vpop.permute.xlu0 %732
        %vm735 = vcmask 1048320
        %736 = vst.msk [vmem:[#allocation2] sm:$0xff] %vm735, %v733
        %s737 = scalar_lea.vmem %s319, 32
        %v738 = vld [vmem:[%s737] sm:$0xff]
        %s739 = scalar_lea.vmem %s328, 32
        %v740 = vld [vmem:[%s739] sm:$0xff]
        %742 = vset.pattern.permute.xlu0 0
        %743 = vperm.xlu0 %742, %v740
        %v744 = vpop.permute.xlu0 %743
        %v747 = vsel %vm358, %v738, 0
        %749 = vmatprep.subr.mxu0 0.0
        %750 = vmatpush1.msra.mxu0 %v332
        %751 = vmatprep.subr.mxu0 0.0
        %752 = vmatpush1.msra.mxu0 %v338
        %753 = vmatprep.subr.mxu0 0.0
        %754 = vmatpush1.msra.mxu0 %v346
        %755 = vmatprep.subr.mxu0 0.0
        %756 = vmatpush1.msra.mxu0 0.0
        %757 = vmatprep.subr.mxu0 0.0
        %758 = vmatpush1.msra.mxu0 0.0
        %759 = vmatprep.subr.mxu0 0.0
        %760 = vmatpush1.msra.mxu0 0.0
        %761 = vmatprep.subr.mxu0 0.0
        %762 = vmatpush1.msra.mxu0 0.0
        %763 = vmatprep.subr.mxu0 0.0
        %764 = vmatpush1.msra.mxu0 0.0
        %765 = vmatprep.subr.mxu0 0.0
        %766 = vmatpush1.msra.mxu0 0.0
        %767 = vmatprep.subr.mxu0 0.0
        %768 = vmatpush1.msra.mxu0 0.0
        %769 = vmatprep.subr.mxu0 0.0
        %770 = vmatpush1.msra.mxu0 0.0
        %771 = vmatprep.subr.mxu0 0.0
        %772 = vmatpush1.msra.mxu0 0.0
        %773 = vmatprep.subr.mxu0 0.0
        %774 = vmatpush1.msra.mxu0 0.0
        %775 = vmatprep.subr.mxu0 0.0
        %776 = vmatpush1.msra.mxu0 0.0
        %777 = vmatprep.subr.mxu0 0.0
        %778 = vmatpush1.msra.mxu0 0.0
        %779 = vmatprep.subr.mxu0 0.0
        %780 = vmatpush1.msra.mxu0 0.0
        %781 = vmatprep.subr.mxu0 0.0
        %782 = vmatpush1.msra.mxu0 0.0
        %783 = vmatprep.subr.mxu0 0.0
        %784 = vmatpush1.msra.mxu0 0.0
        %785 = vmatprep.subr.mxu0 0.0
        %786 = vmatpush1.msra.mxu0 0.0
        %787 = vmatprep.subr.mxu0 0.0
        %788 = vmatpush1.msra.mxu0 0.0
        %789 = vmatprep.subr.mxu0 0.0
        %790 = vmatpush1.msra.mxu0 0.0
        %791 = vmatprep.subr.mxu0 0.0
        %792 = vmatpush1.msra.mxu0 0.0
        %793 = vmatprep.subr.mxu0 0.0
        %794 = vmatpush1.msra.mxu0 0.0
        %795 = vmatprep.subr.mxu0 0.0
        %796 = vmatpush1.msra.mxu0 0.0
        %797 = vmatprep.subr.mxu0 0.0
        %798 = vmatpush1.msra.mxu0 0.0
        %799 = vmatprep.subr.mxu0 0.0
        %800 = vmatpush1.msra.mxu0 0.0
        %801 = vmatprep.subr.mxu0 0.0
        %802 = vmatpush1.msra.mxu0 0.0
        %803 = vmatprep.subr.mxu0 0.0
        %804 = vmatpush1.msra.mxu0 0.0
        %805 = vmatprep.subr.mxu0 0.0
        %806 = vmatpush1.msra.mxu0 0.0
        %807 = vmatprep.subr.mxu0 0.0
        %808 = vmatpush1.msra.mxu0 0.0
        %809 = vmatprep.subr.mxu0 0.0
        %810 = vmatpush1.msra.mxu0 0.0
        %811 = vmatprep.subr.mxu0 0.0
        %812 = vmatpush1.msra.mxu0 0.0
        %813 = vmatprep.mubr.f32.mxu0 0.0
        %814 = vmatmul.mubr.f32.gmra.mrb[0].mxu0 %v747
        %v815 = vpop.f32.mrb[0].mxu0
        %v816 = vadd.f32 %v744, %v815
        %v817 = vpop.f32.mrb[0].mxu0
        %818 = vdwg.mxu0
        %vm819 = vcmp.gt.f32.partialorder %v816, 0.0
        %v820 = vmul.f32 %v816, 0.2
        %v821 = vsel %vm819, %v816, %v820
        %822 = vst.msk [vmem:[#allocation2 + $0x8] sm:$0xff] %vm435, %v821
        %s823 = scalar_lea.vmem %s319, 40
        %v824 = vld [vmem:[%s823] sm:$0xff]
        %s825 = scalar_lea.vmem %s328, 40
        %v826 = vld [vmem:[%s825] sm:$0xff]
        %828 = vset.pattern.permute.xlu0 0
        %829 = vperm.xlu0 %828, %v826
        %v830 = vpop.permute.xlu0 %829
        %832 = vrot.lane.b32.xlu0 %v332, 96
        %v833 = vpop.permute.xlu0 %832
        %834 = vrot.lane.b32.xlu0 %v338, 96
        %v835 = vpop.permute.xlu0 %834
        %836 = vrot.lane.b32.xlu0 %v346, 96
        %v837 = vpop.permute.xlu0 %836
        %v842 = vsel %vm358, %v824, 0
        %844 = vmatprep.subr.mxu0 0.0
        %845 = vmatpush1.msra.mxu0 %v833
        %846 = vmatprep.subr.mxu0 0.0
        %847 = vmatpush1.msra.mxu0 %v835
        %848 = vmatprep.subr.mxu0 0.0
        %849 = vmatpush1.msra.mxu0 %v837
        %850 = vmatprep.subr.mxu0 0.0
        %851 = vmatpush1.msra.mxu0 0.0
        %852 = vmatprep.subr.mxu0 0.0
        %853 = vmatpush1.msra.mxu0 0.0
        %854 = vmatprep.subr.mxu0 0.0
        %855 = vmatpush1.msra.mxu0 0.0
        %856 = vmatprep.subr.mxu0 0.0
        %857 = vmatpush1.msra.mxu0 0.0
        %858 = vmatprep.subr.mxu0 0.0
        %859 = vmatpush1.msra.mxu0 0.0
        %860 = vmatprep.subr.mxu0 0.0
        %861 = vmatpush1.msra.mxu0 0.0
        %862 = vmatprep.subr.mxu0 0.0
        %863 = vmatpush1.msra.mxu0 0.0
        %864 = vmatprep.subr.mxu0 0.0
        %865 = vmatpush1.msra.mxu0 0.0
        %866 = vmatprep.subr.mxu0 0.0
        %867 = vmatpush1.msra.mxu0 0.0
        %868 = vmatprep.subr.mxu0 0.0
        %869 = vmatpush1.msra.mxu0 0.0
        %870 = vmatprep.subr.mxu0 0.0
        %871 = vmatpush1.msra.mxu0 0.0
        %872 = vmatprep.subr.mxu0 0.0
        %873 = vmatpush1.msra.mxu0 0.0
        %874 = vmatprep.subr.mxu0 0.0
        %875 = vmatpush1.msra.mxu0 0.0
        %876 = vmatprep.subr.mxu0 0.0
        %877 = vmatpush1.msra.mxu0 0.0
        %878 = vmatprep.subr.mxu0 0.0
        %879 = vmatpush1.msra.mxu0 0.0
        %880 = vmatprep.subr.mxu0 0.0
        %881 = vmatpush1.msra.mxu0 0.0
        %882 = vmatprep.subr.mxu0 0.0
        %883 = vmatpush1.msra.mxu0 0.0
        %884 = vmatprep.subr.mxu0 0.0
        %885 = vmatpush1.msra.mxu0 0.0
        %886 = vmatprep.subr.mxu0 0.0
        %887 = vmatpush1.msra.mxu0 0.0
        %888 = vmatprep.subr.mxu0 0.0
        %889 = vmatpush1.msra.mxu0 0.0
        %890 = vmatprep.subr.mxu0 0.0
        %891 = vmatpush1.msra.mxu0 0.0
        %892 = vmatprep.subr.mxu0 0.0
        %893 = vmatpush1.msra.mxu0 0.0
        %894 = vmatprep.subr.mxu0 0.0
        %895 = vmatpush1.msra.mxu0 0.0
        %896 = vmatprep.subr.mxu0 0.0
        %897 = vmatpush1.msra.mxu0 0.0
        %898 = vmatprep.subr.mxu0 0.0
        %899 = vmatpush1.msra.mxu0 0.0
        %900 = vmatprep.subr.mxu0 0.0
        %901 = vmatpush1.msra.mxu0 0.0
        %902 = vmatprep.subr.mxu0 0.0
        %903 = vmatpush1.msra.mxu0 0.0
        %904 = vmatprep.subr.mxu0 0.0
        %905 = vmatpush1.msra.mxu0 0.0
        %906 = vmatprep.subr.mxu0 0.0
        %907 = vmatpush1.msra.mxu0 0.0
        %908 = vmatprep.mubr.f32.mxu0 0.0
        %909 = vmatmul.mubr.f32.gmra.mrb[0].mxu0 %v842
        %v910 = vpop.f32.mrb[0].mxu0
        %v911 = vadd.f32 %v830, %v910
        %v912 = vpop.f32.mrb[0].mxu0
        %913 = vdwg.mxu0
        %vm914 = vcmp.gt.f32.partialorder %v911, 0.0
        %v915 = vmul.f32 %v911, 0.2
        %v916 = vsel %vm914, %v911, %v915
        %918 = vrot.lane.b32.xlu0 %v916, 32
        %v919 = vpop.permute.xlu0 %918
        %921 = vst.msk [vmem:[#allocation2 + $0x8] sm:$0xff] %vm535, %v919
        %v922 = vld [vmem:[#allocation2] sm:$0xff]
        %v923 = vld [vmem:[#allocation2 + $0x8] sm:$0xff]
        %926 = vrot.lane.b32.xlu0 %v922, 126
        %v927 = vpop.permute.xlu0 %926
        %928 = vrot.lane.b32.xlu0 %v923, 126
        %v929 = vpop.permute.xlu0 %928
        %v930 = vsel %vm347, %v927, %v929
        %931 = vrot.lane.b32.xlu0 %v922, 124
        %v932 = vpop.permute.xlu0 %931
        %933 = vrot.lane.b32.xlu0 %v923, 124
        %v934 = vpop.permute.xlu0 %933
        %vm935 = vcmask 1014784
        %v936 = vsel %vm935, %v932, %v934
        %v937 = vld [vmem:[%s3] sm:$0xff]
        %v938 = vld [vmem:[%s4] sm:$0xff]
        %940 = vset.pattern.permute.xlu0 0
        %941 = vperm.xlu0 %940, %v938
        %v942 = vpop.permute.xlu0 %941
        %944 = vrot.lane.b32.xlu0 %v922, 98
        %v945 = vpop.permute.xlu0 %944
        %946 = vrot.lane.b32.xlu0 %v923, 98
        %v947 = vpop.permute.xlu0 %946
        %948 = vrot.lane.b32.xlu0 %v930, 98
        %v949 = vpop.permute.xlu0 %948
        %950 = vrot.lane.b32.xlu0 %v929, 98
        %v951 = vpop.permute.xlu0 %950
        %952 = vrot.lane.b32.xlu0 %v936, 98
        %v953 = vpop.permute.xlu0 %952
        %954 = vrot.lane.b32.xlu0 %v934, 98
        %v955 = vpop.permute.xlu0 %954
        %vm956 = vcmask 801792
        %v957 = vsel %vm956, %v945, %v947
        %v958 = vsel %vm956, %v949, %v951
        %v959 = vsel %vm956, %v953, %v955
        %v964 = vsel %vm358, %v937, 0
        %966 = vmatprep.subr.mxu0 0.0
        %967 = vmatpush1.msra.mxu0 %v957
        %968 = vmatprep.subr.mxu0 0.0
        %969 = vmatpush1.msra.mxu0 %v958
        %970 = vmatprep.subr.mxu0 0.0
        %971 = vmatpush1.msra.mxu0 %v959
        %972 = vmatprep.subr.mxu0 0.0
        %973 = vmatpush1.msra.mxu0 0.0
        %974 = vmatprep.subr.mxu0 0.0
        %975 = vmatpush1.msra.mxu0 0.0
        %976 = vmatprep.subr.mxu0 0.0
        %977 = vmatpush1.msra.mxu0 0.0
        %978 = vmatprep.subr.mxu0 0.0
        %979 = vmatpush1.msra.mxu0 0.0
        %980 = vmatprep.subr.mxu0 0.0
        %981 = vmatpush1.msra.mxu0 0.0
        %982 = vmatprep.subr.mxu0 0.0
        %983 = vmatpush1.msra.mxu0 0.0
        %984 = vmatprep.subr.mxu0 0.0
        %985 = vmatpush1.msra.mxu0 0.0
        %986 = vmatprep.subr.mxu0 0.0
        %987 = vmatpush1.msra.mxu0 0.0
        %988 = vmatprep.subr.mxu0 0.0
        %989 = vmatpush1.msra.mxu0 0.0
        %990 = vmatprep.subr.mxu0 0.0
        %991 = vmatpush1.msra.mxu0 0.0
        %992 = vmatprep.subr.mxu0 0.0
        %993 = vmatpush1.msra.mxu0 0.0
        %994 = vmatprep.subr.mxu0 0.0
        %995 = vmatpush1.msra.mxu0 0.0
        %996 = vmatprep.subr.mxu0 0.0
        %997 = vmatpush1.msra.mxu0 0.0
        %998 = vmatprep.subr.mxu0 0.0
        %999 = vmatpush1.msra.mxu0 0.0
        %1000 = vmatprep.subr.mxu0 0.0
        %1001 = vmatpush1.msra.mxu0 0.0
        %1002 = vmatprep.subr.mxu0 0.0
        %1003 = vmatpush1.msra.mxu0 0.0
        %1004 = vmatprep.subr.mxu0 0.0
        %1005 = vmatpush1.msra.mxu0 0.0
        %1006 = vmatprep.subr.mxu0 0.0
        %1007 = vmatpush1.msra.mxu0 0.0
        %1008 = vmatprep.subr.mxu0 0.0
        %1009 = vmatpush1.msra.mxu0 0.0
        %1010 = vmatprep.subr.mxu0 0.0
        %1011 = vmatpush1.msra.mxu0 0.0
        %1012 = vmatprep.subr.mxu0 0.0
        %1013 = vmatpush1.msra.mxu0 0.0
        %1014 = vmatprep.subr.mxu0 0.0
        %1015 = vmatpush1.msra.mxu0 0.0
        %1016 = vmatprep.subr.mxu0 0.0
        %1017 = vmatpush1.msra.mxu0 0.0
        %1018 = vmatprep.subr.mxu0 0.0
        %1019 = vmatpush1.msra.mxu0 0.0
        %1020 = vmatprep.subr.mxu0 0.0
        %1021 = vmatpush1.msra.mxu0 0.0
        %1022 = vmatprep.subr.mxu0 0.0
        %1023 = vmatpush1.msra.mxu0 0.0
        %1024 = vmatprep.subr.mxu0 0.0
        %1025 = vmatpush1.msra.mxu0 0.0
        %1026 = vmatprep.subr.mxu0 0.0
        %1027 = vmatpush1.msra.mxu0 0.0
        %1028 = vmatprep.subr.mxu0 0.0
        %1029 = vmatpush1.msra.mxu0 0.0
        %1030 = vmatprep.mubr.f32.mxu0 0.0
        %1031 = vmatmul.mubr.f32.gmra.mrb[0].mxu0 %v964
        %v1032 = vpop.f32.mrb[0].mxu0
        %v1033 = vadd.f32 %v942, %v1032
        %v1034 = vpop.f32.mrb[0].mxu0
        %1035 = vdwg.mxu0
        %vm1036 = vcmp.gt.f32.partialorder %v1033, 0.0
        %v1037 = vmul.f32 %v1033, 0.2
        %v1038 = vsel %vm1036, %v1033, %v1037
        %1039 = vst [vmem:[%s310] sm:$0xff] %v1038
        %s1040 = sand.u32 %s176, 1
        %s1041 = scalar_lea.sflag [#allocation5], %s1040
        %s1042 = sand.u32 %s176, 1
        %s1043 = smul.addr %s1042, 8
        %s1044 = scalar_lea.vmem [#allocation6], %s1043
        // Predicated region
        $region45: #{tpu_custom_call.1} parent=39 // pred_check
          %p1045 = pneg %p186
        $region46: #{tpu_custom_call.1} parent=39 // pred_check_branch
          %1047 = sbr.rel (%p1045) target = $region48
        $region47: #{tpu_custom_call.1} parent=39 // pred_region
          %s1049 = ssub.s32 128, 128
          %1050 = vsyncadd %s1041, %s1049
          %s1051 = smul.addr %s26, 2
          %s1052 = sadd.s32 %s27, %s1051
          %s1053 = smul.addr %s1052, 128
          %s1054 = scalar_lea.hbm %s5, %s1053
          %s1056 = sshll.u32 %s1044, 4
          %s1057 = int_to_ptr.vmem [resolvable:$true] %s1056
          %1059 = dma.vmem_to_hbm [thread:$0]  %s1057, 128, %s1054, %s1041
        $region48: #{tpu_custom_call.1} parent=39 // pred_fallthru
          _
      $region40: #{tpu_custom_call.1} parent=5 // pred_fallthru
        _
      %p1060 = scmp.le.s32.totalorder 2, %s17
      // Predicated region
      $region49: #{tpu_custom_call.1} parent=5 // pred_check
        %p1061 = pneg %p1060
      $region50: #{tpu_custom_call.1} parent=5 // pred_check_branch
        %1063 = sbr.rel (%p1061) target = $region52
      $region51: #{tpu_custom_call.1} parent=5 // pred_region
        %s1064 = ssub.s32 %s17, 2
        // Predicated region
        $region53: #{tpu_custom_call.1} parent=51 // pred_check
          %p1065 = pneg %p192
        $region54: #{tpu_custom_call.1} parent=51 // pred_check_branch
          %1067 = sbr.rel (%p1065) target = $region56
        $region55: #{tpu_custom_call.1} parent=51 // pred_region
          %s1068 = sand.u32 %s177, 1
          %s1069 = scalar_lea.sflag [#allocation5], %s1068
          %s1070 = sand.u32 %s177, 1
          %s1071 = smul.addr %s1070, 8
          %s1072 = scalar_lea.vmem [#allocation6], %s1071
          %1073 = dma.done %s1069, 128
        $region56: #{tpu_custom_call.1} parent=51 // pred_fallthru
          _
      $region52: #{tpu_custom_call.1} parent=5 // pred_fallthru
        _
    $region6: #{tpu_custom_call.1} parent=1 // loop_footer
      %s21 = sadd.s32 1, %s17
    $region7: #{tpu_custom_call.1} parent=1 // loop_footer_branch
      %16 = sbr.rel target = $region3
    $region8: #{tpu_custom_call.1} parent=1 // loop_exit
      _
    %1074 = vsyncpa [#allocation4], 1
    %s1075 = scalar_lea.sflag [#allocation4], 1
    %1076 = vsyncpa %s1075, 1
    %1077 = vsyncpa [#allocation5], 1
    %s1078 = scalar_lea.sflag [#allocation5], 1
    %1079 = vsyncpa %s1078, 1

</llo_original>
